<compile_context>
chip_gen: v7x
topology: tpu7x:2x2x1
jax: 0.10.0
libtpu: 0.0.40
codegen_flags: <defaults>
</compile_context>

<pallas_src>
import jax
import jax.numpy as jnp
from jax.experimental import pallas as pl
from jax.experimental.pallas import tpu as pltpu


def _round_up(x, m):
    return (x + m - 1) // m * m


# Tile candidates (multiples of 128).  v5e prefers <= 256; v6e/v7x take larger.
_TILE_CANDIDATES = (512, 384, 256, 128)


def _pick_tile(padded_dim):
    for c in _TILE_CANDIDATES:
        if c <= padded_dim and padded_dim % c == 0:
            return c
    return 128


# ---------------------------------------------------------------------------
# Kernel 1: attention head only (fc1 + relu + fc2 + softmax) on pooled (B, C).
# The average pool itself is done by XLA in the wrapper (one streaming read).
# ---------------------------------------------------------------------------
def _attention_kernel(pooled_ref, w1t_ref, b1_ref, w2t_ref, b2_ref, attn_ref):
    pooled = pooled_ref[...]                                            # (B, C)
    h = jnp.dot(pooled, w1t_ref[...],
                preferred_element_type=jnp.float32) + b1_ref[...]       # (B, K)
    h = jnp.maximum(h, 0.0)
    logits = jnp.dot(h, w2t_ref[...],
                     preferred_element_type=jnp.float32) + b2_ref[...]  # (B, K)
    m = jnp.max(logits, axis=1, keepdims=True)
    e = jnp.exp(logits - m)
    attn_ref[...] = e / jnp.sum(e, axis=1, keepdims=True)


# ---------------------------------------------------------------------------
# Kernel 2: fused (attention-weighted weight mix) + per-sample conv matmul.
# Grid = (B, P tiles, F tiles); F is the reduction axis (last, "arbitrary").
# ---------------------------------------------------------------------------
def _dynconv_kernel(attn_ref, p_ref, w_ref, b_ref, o_ref, acc_ref):
    """
    attn_ref : SMEM (B, K)          softmax attention (f32)
    p_ref    : VMEM (1, TP, TF)     im2col patch tile (compute dtype)
    w_ref    : VMEM (K, TF, O_pad)  candidate weights, F-major / O lane-dense
    b_ref    : VMEM (K, 1, O_pad)   candidate biases (f32)
    o_ref    : VMEM (1, O_pad, TP)  output tile in NCHW-friendly layout (f32)
    acc_ref  : VMEM (TP, O_pad)     f32 accumulator (lives across the F axis)
    """
    b = pl.program_id(0)
    f = pl.program_id(2)
    num_f = pl.num_programs(2)
    K = w_ref.shape[0]

    @pl.when(f == 0)
    def _init():
        acc_ref[...] = jnp.zeros_like(acc_ref)

    # Per-sample weight tile: sum_k attn[b, k] * W_k — K fused multiply-adds on
    # the VPU (in f32), then a single cast to the MXU input dtype.
    w_mix = attn_ref[b, 0] * w_ref[0]
    for k in range(1, K):
        w_mix = w_mix + attn_ref[b, k] * w_ref[k]

    acc_ref[...] += jnp.dot(p_ref[0], w_mix.astype(p_ref.dtype),
                            preferred_element_type=jnp.float32)

    @pl.when(f == num_f - 1)
    def _finalize():
        bias = attn_ref[b, 0] * b_ref[0]
        for k in range(1, K):
            bias = bias + attn_ref[b, k] * b_ref[k]
        y = acc_ref[...] + bias                  # (TP, O_pad) + (1, O_pad)
        o_ref[0] = y.T.astype(o_ref.dtype)       # write (O_pad, TP) => NCHW layout


class DynamicConv2d:
    """JAX/Pallas port of the PyTorch Dynamic_conv2d module (forward only)."""

    def __init__(self, in_planes, out_planes, kernel_size, ratio=0.25,
                 stride=1, padding=0, dilation=1, groups=1, bias=True, K=4,
                 key=jax.random.PRNGKey(0), compute_dtype=jnp.bfloat16):
        assert in_planes % groups == 0
        # TODO(synk): groups > 1 and dilation > 1 are not implemented in this kernel.
        assert groups == 1 and dilation == 1
        # NOTE: `ratio` is accepted but unused — the reference attention2d ignores
        # its `ratios` argument (fc1 maps in_planes -> K directly), so we match it.
        self.in_planes, self.out_planes = in_planes, out_planes
        self.kernel_size, self.stride, self.padding = kernel_size, stride, padding
        self.K = K
        self.compute_dtype = compute_dtype

        k1, k2, k3, k4, k5, k6 = jax.random.split(key, 6)
        # attention2d params (1x1 Conv2d weights squeezed to 2-D)
        self.w1 = 0.1 * jax.random.normal(k1, (K, in_planes), jnp.float32)   # fc1
        self.b1 = 0.1 * jax.random.normal(k2, (1, K), jnp.float32)
        self.w2 = 0.1 * jax.random.normal(k3, (K, K), jnp.float32)           # fc2
        self.b2 = 0.1 * jax.random.normal(k4, (1, K), jnp.float32)
        # dynamic conv params
        self.weight = 0.1 * jax.random.normal(
            k5, (K, out_planes, in_planes // groups, kernel_size, kernel_size),
            jnp.float32)
        self.bias = (0.1 * jax.random.normal(k6, (K, out_planes), jnp.float32)
                     if bias else None)

        # ---- precomputed, padded, MXU-friendly parameter layouts --------------
        F_dim = (in_planes // groups) * kernel_size * kernel_size
        self._F = F_dim
        self._O_pad = _round_up(out_planes, 128)        # lane-dense output channels
        self._TF = _pick_tile(_round_up(F_dim, 128))    # contraction tile
        self._F_pad = _round_up(F_dim, self._TF)

        # (K, O, C, kh, kw) -> (K, F, O) with F ordered (c, kh, kw) to match im2col.
        w_fo = jnp.transpose(self.weight, (0, 2, 3, 4, 1)).reshape(K, F_dim, out_planes)
        w_fo = jnp.pad(w_fo, ((0, 0),
                              (0, self._F_pad - F_dim),
                              (0, self._O_pad - out_planes)))
        self._w_fo = w_fo.astype(compute_dtype)

        bias_arr = (self.bias if self.bias is not None
                    else jnp.zeros((K, out_planes), jnp.float32))
        self._bias_pad = jnp.pad(
            bias_arr, ((0, 0), (0, self._O_pad - out_planes))
        ).reshape(K, 1, self._O_pad).astype(jnp.float32)

        self._w1t = self.w1.T   # (C, K)
        self._w2t = self.w2.T   # (K, K)

        self._forward_jit = jax.jit(self._forward)

    def __call__(self, x):
        return self._forward_jit(x)

    def _forward(self, x):
        B, C, H, W = x.shape
        kz, s, pad = self.kernel_size, self.stride, self.padding
        O, K = self.out_planes, self.K
        F_dim, F_pad, O_pad, TF = self._F, self._F_pad, self._O_pad, self._TF

        # ---- attention branch: avg-pool in plain JAX, tiny Pallas head --------
        pooled = jnp.mean(x, axis=(2, 3))                   # (B, C)
        attn = pl.pallas_call(
            _attention_kernel,
            out_shape=jax.ShapeDtypeStruct((B, K), jnp.float32),
            grid=(1,),
            in_specs=[
                pl.BlockSpec((B, C), lambda i: (0, 0)),
                pl.BlockSpec((C, K), lambda i: (0, 0)),
                pl.BlockSpec((1, K), lambda i: (0, 0)),
                pl.BlockSpec((K, K), lambda i: (0, 0)),
                pl.BlockSpec((1, K), lambda i: (0, 0)),
            ],
            out_specs=pl.BlockSpec((B, K), lambda i: (0, 0)),
            compiler_params=pltpu.CompilerParams(
                dimension_semantics=("arbitrary",)),
        )(pooled, self._w1t, self.b1, self._w2t, self.b2)

        # ---- im2col (single pass, emitted directly in (B, P, F) order) --------
        # TODO(synk): for production shapes, internalize the kz*kz tap loop into
        # the Pallas kernel (strided reads of the padded NHWC input) so the ~9x
        # im2col tensor never touches HBM.
        H_out = (H + 2 * pad - kz) // s + 1
        W_out = (W + 2 * pad - kz) // s + 1
        P_dim = H_out * W_out
        xc = x.astype(self.compute_dtype)
        xp = jnp.pad(xc, ((0, 0), (0, 0), (pad, pad), (pad, pad)))
        cols = []
        for kh in range(kz):
            for kw in range(kz):
                cols.append(xp[:, :, kh:kh + s * H_out:s, kw:kw + s * W_out:s])
        p = jnp.stack(cols, axis=2)                 # (B, C, kz*kz, Ho, Wo)
        p = p.transpose(0, 3, 4, 1, 2)              # (B, Ho, Wo, C, kz*kz)
        patches = p.reshape(B, P_dim, F_dim)        # feature order: c, kh, kw

        P_pad = _round_up(P_dim, 128)
        TP = _pick_tile(P_pad)
        patches = jnp.pad(patches, ((0, 0), (0, P_pad - P_dim), (0, F_pad - F_dim)))

        # ---- fused weight-mix + conv matmul Pallas kernel ----------------------
        itemsize = jnp.dtype(self.compute_dtype).itemsize
        vmem_bytes = (2 * (TP * TF * itemsize           # patch tile (double-buffered)
                           + K * TF * O_pad * itemsize  # weight tile
                           + K * O_pad * 4              # bias
                           + O_pad * TP * 4)            # output tile
                      + TP * O_pad * 4                  # accumulator
                      + (2 << 20))                      # headroom
        vmem_limit = int(min(max(vmem_bytes, 4 << 20), 64 << 20))

        cost = pl.CostEstimate(
            flops=2 * B * P_pad * F_pad * O_pad,
            transcendentals=0,
            bytes_accessed=int(B * P_pad * F_pad * itemsize
                               + B * (P_pad // TP) * K * F_pad * O_pad * itemsize
                               + B * O_pad * P_pad * 4),
        )

        out_pad = pl.pallas_call(
            _dynconv_kernel,
            out_shape=jax.ShapeDtypeStruct((B, O_pad, P_pad), jnp.float32),
            grid=(B, P_pad // TP, F_pad // TF),
            in_specs=[
                pl.BlockSpec(memory_space=pltpu.MemorySpace.SMEM),           # attn
                pl.BlockSpec((1, TP, TF), lambda b, p, f: (b, p, f)),        # patches
                pl.BlockSpec((K, TF, O_pad), lambda b, p, f: (0, f, 0)),     # weights
                pl.BlockSpec((K, 1, O_pad), lambda b, p, f: (0, 0, 0)),      # biases
            ],
            out_specs=pl.BlockSpec((1, O_pad, TP), lambda b, p, f: (b, 0, p)),
            scratch_shapes=[pltpu.VMEM((TP, O_pad), jnp.float32)],
            compiler_params=pltpu.CompilerParams(
                dimension_semantics=("parallel", "parallel", "arbitrary"),
                vmem_limit_bytes=vmem_limit),
            cost_estimate=cost,
        )(attn, patches, self._w_fo, self._bias_pad)

        # (B, O_pad, P_pad): slice away channel/position padding -> NCHW output.
        return out_pad[:, :O, :P_dim].reshape(B, O, H_out, W_out)


def _reference_forward(m: DynamicConv2d, x):
    """Pure-JAX reference mirroring the PyTorch forward."""
    B = x.shape[0]
    pooled = x.mean(axis=(2, 3))
    h = jnp.maximum(pooled @ m.w1.T + m.b1[0], 0.0)
    attn = jax.nn.softmax(h @ m.w2.T + m.b2[0], axis=1)
    aggw = (attn @ m.weight.reshape(m.K, -1)).reshape(
        B, m.out_planes, m.in_planes, m.kernel_size, m.kernel_size)
    aggb = attn @ m.bias if m.bias is not None else None
    outs = []
    for b in range(B):
        y = jax.lax.conv_general_dilated(
            x[b:b + 1], aggw[b], (m.stride, m.stride),
            [(m.padding, m.padding)] * 2,
            dimension_numbers=('NCHW', 'OIHW', 'NCHW'))[0]
        if aggb is not None:
            y = y + aggb[b][:, None, None]
        outs.append(y)
    return jnp.stack(outs)


if __name__ == "__main__":
    key = jax.random.PRNGKey(0)
    k_x, k_p = jax.random.split(key)

    B, C, H, W = 2, 4, 16, 16
    x = jax.random.normal(k_x, (B, C, H, W), jnp.float32)

    # f32 compute path: tight check against the pure-JAX reference.
    mod_f32 = DynamicConv2d(in_planes=C, out_planes=8, kernel_size=3, ratio=0.25,
                            stride=1, padding=1, groups=1, bias=True, K=4,
                            key=k_p, compute_dtype=jnp.float32)
    out = jax.block_until_ready(mod_f32(x))
    ref = _reference_forward(mod_f32, x)
    assert out.shape == ref.shape == (B, 8, 16, 16)
    assert jnp.allclose(out, ref, atol=1e-4, rtol=1e-4), "f32 mismatch vs reference"

    # bf16 matmul path (MXU-friendly on v6e/v7x): looser tolerance.
    mod_bf16 = DynamicConv2d(in_planes=C, out_planes=8, kernel_size=3, ratio=0.25,
                             stride=1, padding=1, groups=1, bias=True, K=4,
                             key=k_p, compute_dtype=jnp.bfloat16)
    out_bf16 = jax.block_until_ready(mod_bf16(x))
    assert out_bf16.shape == ref.shape
    assert jnp.allclose(out_bf16, ref, atol=5e-2, rtol=5e-2), "bf16 mismatch vs reference"

    print("KERNEL_OK")
</pallas_src>

<mosaic_0001>
module attributes {stable_mosaic.version = 11 : i64} {
  func.func @_attention_kernel(%arg0: i32, %arg1: memref<2x4xf32, #tpu.memory_space<vmem>>, %arg2: memref<4x4xf32, #tpu.memory_space<vmem>>, %arg3: memref<1x4xf32, #tpu.memory_space<vmem>>, %arg4: memref<4x4xf32, #tpu.memory_space<vmem>>, %arg5: memref<1x4xf32, #tpu.memory_space<vmem>>, %arg6: memref<2x4xf32, #tpu.memory_space<vmem>>) attributes {dimension_semantics = [#tpu.dimension_semantics<arbitrary>], iteration_bounds = array<i64: 1>, scalar_prefetch = 0 : i64, scratch_operands = 0 : i64, tpu.core_type = #tpu.core_type<tc>, window_params = [{pipeline_mode = #tpu.pipeline_mode<synchronous>, transform_indices = @transform_0, window_bounds = array<i64: 2, 4>}, {pipeline_mode = #tpu.pipeline_mode<synchronous>, transform_indices = @transform_1, window_bounds = array<i64: 4, 4>}, {pipeline_mode = #tpu.pipeline_mode<synchronous>, transform_indices = @transform_2, window_bounds = array<i64: 1, 4>}, {pipeline_mode = #tpu.pipeline_mode<synchronous>, transform_indices = @transform_3, window_bounds = array<i64: 4, 4>}, {pipeline_mode = #tpu.pipeline_mode<synchronous>, transform_indices = @transform_4, window_bounds = array<i64: 1, 4>}, {pipeline_mode = #tpu.pipeline_mode<synchronous>, transform_indices = @transform_5, window_bounds = array<i64: 2, 4>}]} {
    %c0 = arith.constant 0 : index
    %c0_0 = arith.constant 0 : index
    %0 = vector.load %arg1[%c0, %c0_0] : memref<2x4xf32, #tpu.memory_space<vmem>>, vector<2x4xf32>
    %c0_1 = arith.constant 0 : index
    %c0_2 = arith.constant 0 : index
    %1 = vector.load %arg2[%c0_1, %c0_2] : memref<4x4xf32, #tpu.memory_space<vmem>>, vector<4x4xf32>
    %cst = arith.constant dense<0.000000e+00> : vector<2x4xf32>
    %2 = tpu.matmul %0, %1, %cst {dimension_numbers = #tpu.dot_dimension_numbers<[1], [0], [0], [1], [0, 0, 1, 1], [], []>} : vector<2x4xf32>, vector<4x4xf32>, vector<2x4xf32> -> vector<2x4xf32>
    %c0_3 = arith.constant 0 : index
    %c0_4 = arith.constant 0 : index
    %3 = vector.load %arg3[%c0_3, %c0_4] : memref<1x4xf32, #tpu.memory_space<vmem>>, vector<1x4xf32>
    %4 = vector.broadcast %3 : vector<1x4xf32> to vector<2x4xf32>
    %5 = arith.addf %2, %4 : vector<2x4xf32>
    %cst_5 = arith.constant 0.000000e+00 : f32
    %6 = vector.broadcast %cst_5 : f32 to vector<2x4xf32>
    %7 = arith.maximumf %5, %6 : vector<2x4xf32>
    %c0_6 = arith.constant 0 : index
    %c0_7 = arith.constant 0 : index
    %8 = vector.load %arg4[%c0_6, %c0_7] : memref<4x4xf32, #tpu.memory_space<vmem>>, vector<4x4xf32>
    %cst_8 = arith.constant dense<0.000000e+00> : vector<2x4xf32>
    %9 = tpu.matmul %7, %8, %cst_8 {dimension_numbers = #tpu.dot_dimension_numbers<[1], [0], [0], [1], [0, 0, 1, 1], [], []>} : vector<2x4xf32>, vector<4x4xf32>, vector<2x4xf32> -> vector<2x4xf32>
    %c0_9 = arith.constant 0 : index
    %c0_10 = arith.constant 0 : index
    %10 = vector.load %arg5[%c0_9, %c0_10] : memref<1x4xf32, #tpu.memory_space<vmem>>, vector<1x4xf32>
    %11 = vector.broadcast %10 : vector<1x4xf32> to vector<2x4xf32>
    %12 = arith.addf %9, %11 : vector<2x4xf32>
    %cst_11 = arith.constant dense<0xFF800000> : vector<2xf32>
    %13 = vector.multi_reduction <maximumf>, %12, %cst_11 [1] : vector<2x4xf32> to vector<2xf32>
    %14 = vector.shape_cast %13 : vector<2xf32> to vector<2x1xf32>
    %15 = vector.broadcast %14 : vector<2x1xf32> to vector<2x4xf32>
    %16 = arith.subf %12, %15 : vector<2x4xf32>
    %17 = math.exp %16 : vector<2x4xf32>
    %cst_12 = arith.constant dense<0.000000e+00> : vector<2xf32>
    %18 = vector.multi_reduction <add>, %17, %cst_12 [1] : vector<2x4xf32> to vector<2xf32>
    %19 = vector.shape_cast %18 : vector<2xf32> to vector<2x1xf32>
    %20 = vector.broadcast %19 : vector<2x1xf32> to vector<2x4xf32>
    %21 = arith.divf %17, %20 : vector<2x4xf32>
    %c0_13 = arith.constant 0 : index
    %c0_14 = arith.constant 0 : index
    %22 = vector.load %arg6[%c0_13, %c0_14] : memref<2x4xf32, #tpu.memory_space<vmem>>, vector<2x4xf32>
    tpu.vector_store %arg6[%c0_13, %c0_14], %21 {strides = array<i32>} : memref<2x4xf32, #tpu.memory_space<vmem>>, vector<2x4xf32>,
    return
  }
  func.func @transform_0(%arg0: i32) -> (i32, i32) {
    %c0_i32 = arith.constant 0 : i32
    %c0_i32_0 = arith.constant 0 : i32
    %c0_i32_1 = arith.constant 0 : i32
    return %c0_i32, %c0_i32_0 : i32, i32
  }
  func.func @transform_1(%arg0: i32) -> (i32, i32) {
    %c0_i32 = arith.constant 0 : i32
    %c0_i32_0 = arith.constant 0 : i32
    %c0_i32_1 = arith.constant 0 : i32
    return %c0_i32, %c0_i32_0 : i32, i32
  }
  func.func @transform_2(%arg0: i32) -> (i32, i32) {
    %c0_i32 = arith.constant 0 : i32
    %c0_i32_0 = arith.constant 0 : i32
    %c0_i32_1 = arith.constant 0 : i32
    return %c0_i32, %c0_i32_0 : i32, i32
  }
  func.func @transform_3(%arg0: i32) -> (i32, i32) {
    %c0_i32 = arith.constant 0 : i32
    %c0_i32_0 = arith.constant 0 : i32
    %c0_i32_1 = arith.constant 0 : i32
    return %c0_i32, %c0_i32_0 : i32, i32
  }
  func.func @transform_4(%arg0: i32) -> (i32, i32) {
    %c0_i32 = arith.constant 0 : i32
    %c0_i32_0 = arith.constant 0 : i32
    %c0_i32_1 = arith.constant 0 : i32
    return %c0_i32, %c0_i32_0 : i32, i32
  }
  func.func @transform_5(%arg0: i32) -> (i32, i32) {
    %c0_i32 = arith.constant 0 : i32
    %c0_i32_0 = arith.constant 0 : i32
    %c0_i32_1 = arith.constant 0 : i32
    return %c0_i32, %c0_i32_0 : i32, i32
  }
}

module attributes {stable_mosaic.version = 11 : i64} {
  func.func @_dynconv_kernel(%arg0: i32, %arg1: i32, %arg2: i32, %arg3: memref<2x4xf32, #tpu.memory_space<smem>>, %arg4: memref<1x256x128xf32, #tpu.memory_space<vmem>>, %arg5: memref<4x128x128xf32, #tpu.memory_space<vmem>>, %arg6: memref<4x1x128xf32, #tpu.memory_space<vmem>>, %arg7: memref<1x128x256xf32, #tpu.memory_space<vmem>>, %arg8: memref<256x128xf32, #tpu.memory_space<vmem>>) attributes {dimension_semantics = [#tpu.dimension_semantics<parallel>, #tpu.dimension_semantics<parallel>, #tpu.dimension_semantics<arbitrary>], iteration_bounds = array<i64: 2, 1, 1>, scalar_prefetch = 0 : i64, scratch_operands = 1 : i64, tpu.core_type = #tpu.core_type<tc>, window_params = [{transform_indices = @transform_0, window_bounds = array<i64: 2, 4>}, {transform_indices = @transform_1, window_bounds = array<i64: 1, 256, 128>}, {transform_indices = @transform_2, window_bounds = array<i64: 4, 128, 128>}, {pipeline_mode = #tpu.pipeline_mode<synchronous>, transform_indices = @transform_3, window_bounds = array<i64: 4, 1, 128>}, {transform_indices = @transform_4, window_bounds = array<i64: 1, 128, 256>}]} {
    %c0_i32 = arith.constant 0 : i32
    %0 = arith.cmpi eq, %arg2, %c0_i32 : i32
    %1 = arith.extui %0 : i1 to i32
    %c0_i32_0 = arith.constant 0 : i32
    %2 = arith.cmpi ne, %1, %c0_i32_0 : i32
    scf.if %2 {
      %cst_22 = arith.constant 0.000000e+00 : f32
      %39 = vector.broadcast %cst_22 : f32 to vector<256x128xf32>
      %c0_23 = arith.constant 0 : index
      %c0_24 = arith.constant 0 : index
      %40 = vector.load %arg8[%c0_23, %c0_24] : memref<256x128xf32, #tpu.memory_space<vmem>>, vector<256x128xf32>
      tpu.vector_store %arg8[%c0_23, %c0_24], %39 {strides = array<i32>} : memref<256x128xf32, #tpu.memory_space<vmem>>, vector<256x128xf32>,
    } else {
    }
    %3 = arith.index_cast %arg0 : i32 to index
    %c0 = arith.constant 0 : index
    %4 = memref.load %arg3[%3, %c0] : memref<2x4xf32, #tpu.memory_space<smem>>
    %c0_1 = arith.constant 0 : index
    %c0_2 = arith.constant 0 : index
    %c0_3 = arith.constant 0 : index
    %5 = vector.load %arg5[%c0_1, %c0_2, %c0_3] : memref<4x128x128xf32, #tpu.memory_space<vmem>>, vector<1x128x128xf32>
    %6 = vector.shape_cast %5 : vector<1x128x128xf32> to vector<128x128xf32>
    %7 = vector.broadcast %4 : f32 to vector<128x128xf32>
    %8 = arith.mulf %7, %6 : vector<128x128xf32>
    %9 = arith.index_cast %arg0 : i32 to index
    %c1 = arith.constant 1 : index
    %10 = memref.load %arg3[%9, %c1] : memref<2x4xf32, #tpu.memory_space<smem>>
    %c1_4 = arith.constant 1 : index
    %c0_5 = arith.constant 0 : index
    %c0_6 = arith.constant 0 : index
    %11 = vector.load %arg5[%c1_4, %c0_5, %c0_6] : memref<4x128x128xf32, #tpu.memory_space<vmem>>, vector<1x128x128xf32>
    %12 = vector.shape_cast %11 : vector<1x128x128xf32> to vector<128x128xf32>
    %13 = vector.broadcast %10 : f32 to vector<128x128xf32>
    %14 = arith.mulf %13, %12 : vector<128x128xf32>
    %15 = arith.addf %8, %14 : vector<128x128xf32>
    %16 = arith.index_cast %arg0 : i32 to index
    %c2 = arith.constant 2 : index
    %17 = memref.load %arg3[%16, %c2] : memref<2x4xf32, #tpu.memory_space<smem>>
    %c2_7 = arith.constant 2 : index
    %c0_8 = arith.constant 0 : index
    %c0_9 = arith.constant 0 : index
    %18 = vector.load %arg5[%c2_7, %c0_8, %c0_9] : memref<4x128x128xf32, #tpu.memory_space<vmem>>, vector<1x128x128xf32>
    %19 = vector.shape_cast %18 : vector<1x128x128xf32> to vector<128x128xf32>
    %20 = vector.broadcast %17 : f32 to vector<128x128xf32>
    %21 = arith.mulf %20, %19 : vector<128x128xf32>
    %22 = arith.addf %15, %21 : vector<128x128xf32>
    %23 = arith.index_cast %arg0 : i32 to index
    %c3 = arith.constant 3 : index
    %24 = memref.load %arg3[%23, %c3] : memref<2x4xf32, #tpu.memory_space<smem>>
    %c3_10 = arith.constant 3 : index
    %c0_11 = arith.constant 0 : index
    %c0_12 = arith.constant 0 : index
    %25 = vector.load %arg5[%c3_10, %c0_11, %c0_12] : memref<4x128x128xf32, #tpu.memory_space<vmem>>, vector<1x128x128xf32>
    %26 = vector.shape_cast %25 : vector<1x128x128xf32> to vector<128x128xf32>
    %27 = vector.broadcast %24 : f32 to vector<128x128xf32>
    %28 = arith.mulf %27, %26 : vector<128x128xf32>
    %29 = arith.addf %22, %28 : vector<128x128xf32>
    %c0_13 = arith.constant 0 : index
    %c0_14 = arith.constant 0 : index
    %30 = vector.load %arg8[%c0_13, %c0_14] : memref<256x128xf32, #tpu.memory_space<vmem>>, vector<256x128xf32>
    %c0_15 = arith.constant 0 : index
    %c0_16 = arith.constant 0 : index
    %c0_17 = arith.constant 0 : index
    %31 = vector.load %arg4[%c0_15, %c0_16, %c0_17] : memref<1x256x128xf32, #tpu.memory_space<vmem>>, vector<1x256x128xf32>
    %32 = vector.shape_cast %31 : vector<1x256x128xf32> to vector<256x128xf32>
    %cst = arith.constant dense<0.000000e+00> : vector<256x128xf32>
    %33 = tpu.matmul %32, %29, %cst {dimension_numbers = #tpu.dot_dimension_numbers<[1], [0], [0], [1], [0, 0, 1, 1], [], []>} : vector<256x128xf32>, vector<128x128xf32>, vector<256x128xf32> -> vector<256x128xf32>
    %34 = arith.addf %30, %33 : vector<256x128xf32>
    %c0_18 = arith.constant 0 : index
    %c0_19 = arith.constant 0 : index
    %35 = vector.load %arg8[%c0_18, %c0_19] : memref<256x128xf32, #tpu.memory_space<vmem>>, vector<256x128xf32>
    tpu.vector_store %arg8[%c0_18, %c0_19], %34 {strides = array<i32>} : memref<256x128xf32, #tpu.memory_space<vmem>>, vector<256x128xf32>,
    %c0_i32_20 = arith.constant 0 : i32
    %36 = arith.cmpi eq, %arg2, %c0_i32_20 : i32
    %37 = arith.extui %36 : i1 to i32
    %c0_i32_21 = arith.constant 0 : i32
    %38 = arith.cmpi ne, %37, %c0_i32_21 : i32
    scf.if %38 {
      %39 = arith.index_cast %arg0 : i32 to index
      %c0_22 = arith.constant 0 : index
      %40 = memref.load %arg3[%39, %c0_22] : memref<2x4xf32, #tpu.memory_space<smem>>
      %c0_23 = arith.constant 0 : index
      %c0_24 = arith.constant 0 : index
      %c0_25 = arith.constant 0 : index
      %41 = vector.load %arg6[%c0_23, %c0_24, %c0_25] : memref<4x1x128xf32, #tpu.memory_space<vmem>>, vector<1x1x128xf32>
      %42 = vector.shape_cast %41 : vector<1x1x128xf32> to vector<1x128xf32>
      %43 = vector.broadcast %40 : f32 to vector<1x128xf32>
      %44 = arith.mulf %43, %42 : vector<1x128xf32>
      %45 = arith.index_cast %arg0 : i32 to index
      %c1_26 = arith.constant 1 : index
      %46 = memref.load %arg3[%45, %c1_26] : memref<2x4xf32, #tpu.memory_space<smem>>
      %c1_27 = arith.constant 1 : index
      %c0_28 = arith.constant 0 : index
      %c0_29 = arith.constant 0 : index
      %47 = vector.load %arg6[%c1_27, %c0_28, %c0_29] : memref<4x1x128xf32, #tpu.memory_space<vmem>>, vector<1x1x128xf32>
      %48 = vector.shape_cast %47 : vector<1x1x128xf32> to vector<1x128xf32>
      %49 = vector.broadcast %46 : f32 to vector<1x128xf32>
      %50 = arith.mulf %49, %48 : vector<1x128xf32>
      %51 = arith.addf %44, %50 : vector<1x128xf32>
      %52 = arith.index_cast %arg0 : i32 to index
      %c2_30 = arith.constant 2 : index
      %53 = memref.load %arg3[%52, %c2_30] : memref<2x4xf32, #tpu.memory_space<smem>>
      %c2_31 = arith.constant 2 : index
      %c0_32 = arith.constant 0 : index
      %c0_33 = arith.constant 0 : index
      %54 = vector.load %arg6[%c2_31, %c0_32, %c0_33] : memref<4x1x128xf32, #tpu.memory_space<vmem>>, vector<1x1x128xf32>
      %55 = vector.shape_cast %54 : vector<1x1x128xf32> to vector<1x128xf32>
      %56 = vector.broadcast %53 : f32 to vector<1x128xf32>
      %57 = arith.mulf %56, %55 : vector<1x128xf32>
      %58 = arith.addf %51, %57 : vector<1x128xf32>
      %59 = arith.index_cast %arg0 : i32 to index
      %c3_34 = arith.constant 3 : index
      %60 = memref.load %arg3[%59, %c3_34] : memref<2x4xf32, #tpu.memory_space<smem>>
      %c3_35 = arith.constant 3 : index
      %c0_36 = arith.constant 0 : index
      %c0_37 = arith.constant 0 : index
      %61 = vector.load %arg6[%c3_35, %c0_36, %c0_37] : memref<4x1x128xf32, #tpu.memory_space<vmem>>, vector<1x1x128xf32>
      %62 = vector.shape_cast %61 : vector<1x1x128xf32> to vector<1x128xf32>
      %63 = vector.broadcast %60 : f32 to vector<1x128xf32>
      %64 = arith.mulf %63, %62 : vector<1x128xf32>
      %65 = arith.addf %58, %64 : vector<1x128xf32>
      %c0_38 = arith.constant 0 : index
      %c0_39 = arith.constant 0 : index
      %66 = vector.load %arg8[%c0_38, %c0_39] : memref<256x128xf32, #tpu.memory_space<vmem>>, vector<256x128xf32>
      %67 = vector.broadcast %65 : vector<1x128xf32> to vector<256x128xf32>
      %68 = arith.addf %66, %67 : vector<256x128xf32>
      %69 = tpu.transpose %68, [1, 0] : vector<256x128xf32> -> vector<128x256xf32>
      %c0_40 = arith.constant 0 : index
      %c0_41 = arith.constant 0 : index
      %c0_42 = arith.constant 0 : index
      %70 = vector.load %arg7[%c0_40, %c0_41, %c0_42] : memref<1x128x256xf32, #tpu.memory_space<vmem>>, vector<1x128x256xf32>
      %71 = vector.shape_cast %70 : vector<1x128x256xf32> to vector<128x256xf32>
      %72 = vector.shape_cast %69 : vector<128x256xf32> to vector<1x128x256xf32>
      tpu.vector_store %arg7[%c0_40, %c0_41, %c0_42], %72 {strides = array<i32>} : memref<1x128x256xf32, #tpu.memory_space<vmem>>, vector<1x128x256xf32>,
    } else {
    }
    return
  }
  func.func @transform_0(%arg0: i32, %arg1: i32, %arg2: i32) -> (i32, i32) {
    %c0_i32 = arith.constant 0 : i32
    %c0_i32_0 = arith.constant 0 : i32
    %c0_i32_1 = arith.constant 0 : i32
    return %c0_i32, %c0_i32_0 : i32, i32
  }
  func.func @transform_1(%arg0: i32, %arg1: i32, %arg2: i32) -> (i32, i32, i32) {
    %c0_i32 = arith.constant 0 : i32
    return %arg0, %arg1, %arg2 : i32, i32, i32
  }
  func.func @transform_2(%arg0: i32, %arg1: i32, %arg2: i32) -> (i32, i32, i32) {
    %c0_i32 = arith.constant 0 : i32
    %c0_i32_0 = arith.constant 0 : i32
    %c0_i32_1 = arith.constant 0 : i32
    return %c0_i32, %arg2, %c0_i32_0 : i32, i32, i32
  }
  func.func @transform_3(%arg0: i32, %arg1: i32, %arg2: i32) -> (i32, i32, i32) {
    %c0_i32 = arith.constant 0 : i32
    %c0_i32_0 = arith.constant 0 : i32
    %c0_i32_1 = arith.constant 0 : i32
    %c0_i32_2 = arith.constant 0 : i32
    return %c0_i32, %c0_i32_0, %c0_i32_1 : i32, i32, i32
  }
  func.func @transform_4(%arg0: i32, %arg1: i32, %arg2: i32) -> (i32, i32, i32) {
    %c0_i32 = arith.constant 0 : i32
    %c0_i32_0 = arith.constant 0 : i32
    return %arg0, %c0_i32, %arg1 : i32, i32, i32
  }
}

</mosaic_0001>

<llo_original>
// kernel: _forward.2
$region0: #{_forward.2}
  #allocation0 [shape = 'u32[]', space=smem, size = 0x4, offset = 0x4, fixed_abs, tag = 'smem constant byte address 0x4 - core index']
  #allocation1 [shape = 'u32[144,128]{1,0:T(1,128)}', space=vmem, size = 0x12000, scoped, tag = 'internal scratch']
  %s0 = inlined_call_operand.vmem [shape: f32[2,4], index: 0, kind: input, shape index: {}]
  %s1 = inlined_call_operand.vmem [shape: f32[4,4], index: 1, kind: input, shape index: {}]
  %s2 = inlined_call_operand.vmem [shape: f32[1,4], index: 2, kind: input, shape index: {}]
  %s3 = inlined_call_operand.vmem [shape: f32[4,4], index: 3, kind: input, shape index: {}]
  %s4 = inlined_call_operand.vmem [shape: f32[1,4], index: 4, kind: input, shape index: {}]
  %s5 = inlined_call_operand.vmem [shape: f32[2,4], index: 5, kind: output, shape index: {}]
  %s6 = sld [smem:[#allocation0]]
  $region30: #{_forward.2} parent=0
    _
  %s8 = ssub.s32 1, %s6
  %s9 = scalar_select 0, %s8, %s6
  // Predicated region
  $region2: #{_forward.2} parent=0 // pred_check
    _
  $region3: #{_forward.2} parent=0 // pred_check_branch
    %11 = sbr.rel (0) target = $region5
  $region4: #{_forward.2} parent=0 // pred_region
    _
  $region5: #{_forward.2} parent=0 // pred_fallthru
    _
  // Predicated region
  $region6: #{_forward.2} parent=0 // pred_check
    _
  $region7: #{_forward.2} parent=0 // pred_check_branch
    %13 = sbr.rel (0) target = $region9
  $region8: #{_forward.2} parent=0 // pred_region
    _
  $region9: #{_forward.2} parent=0 // pred_fallthru
    _
  // Predicated region
  $region10: #{_forward.2} parent=0 // pred_check
    _
  $region11: #{_forward.2} parent=0 // pred_check_branch
    %15 = sbr.rel (0) target = $region13
  $region12: #{_forward.2} parent=0 // pred_region
    _
  $region13: #{_forward.2} parent=0 // pred_fallthru
    _
  // Predicated region
  $region14: #{_forward.2} parent=0 // pred_check
    _
  $region15: #{_forward.2} parent=0 // pred_check_branch
    %17 = sbr.rel (0) target = $region17
  $region16: #{_forward.2} parent=0 // pred_region
    _
  $region17: #{_forward.2} parent=0 // pred_fallthru
    _
  // Predicated region
  $region18: #{_forward.2} parent=0 // pred_check
    _
  $region19: #{_forward.2} parent=0 // pred_check_branch
    %19 = sbr.rel (0) target = $region21
  $region20: #{_forward.2} parent=0 // pred_region
    _
  $region21: #{_forward.2} parent=0 // pred_fallthru
    _
  %v20 = vld [vmem:[%s0] sm:$0x3]
  %v21 = vld [vmem:[%s1] sm:$0xf]
  %v22 = vld [vmem:[%s2] sm:$0x1]
  %v24 = vlaneseq
  %v25 = vshrl.u32 %v24, 7
  %v26 = vsub.s32 0, %v25
  %v27 = vrot.slane %v22, %v26
  %vm29 = vcmask 31744
  %v31 = vsel %vm29, %v20, 0
  %vm33 = vcmask 1043456
  %v35 = vsel %vm33, %v21, 0
  %37 = vmatprep.subr.mxu0 0.0
  %38 = vmatpush1.msra.mxu0 %v35
  %39 = vmatprep.subr.mxu0 0.0
  %40 = vmatpush1.msra.mxu0 0.0
  %41 = vmatprep.subr.mxu0 0.0
  %42 = vmatpush1.msra.mxu0 0.0
  %43 = vmatprep.subr.mxu0 0.0
  %44 = vmatpush1.msra.mxu0 0.0
  %45 = vmatprep.subr.mxu0 0.0
  %46 = vmatpush1.msra.mxu0 0.0
  %47 = vmatprep.subr.mxu0 0.0
  %48 = vmatpush1.msra.mxu0 0.0
  %49 = vmatprep.subr.mxu0 0.0
  %50 = vmatpush1.msra.mxu0 0.0
  %51 = vmatprep.subr.mxu0 0.0
  %52 = vmatpush1.msra.mxu0 0.0
  %53 = vmatprep.subr.mxu0 0.0
  %54 = vmatpush1.msra.mxu0 0.0
  %55 = vmatprep.subr.mxu0 0.0
  %56 = vmatpush1.msra.mxu0 0.0
  %57 = vmatprep.subr.mxu0 0.0
  %58 = vmatpush1.msra.mxu0 0.0
  %59 = vmatprep.subr.mxu0 0.0
  %60 = vmatpush1.msra.mxu0 0.0
  %61 = vmatprep.subr.mxu0 0.0
  %62 = vmatpush1.msra.mxu0 0.0
  %63 = vmatprep.subr.mxu0 0.0
  %64 = vmatpush1.msra.mxu0 0.0
  %65 = vmatprep.subr.mxu0 0.0
  %66 = vmatpush1.msra.mxu0 0.0
  %67 = vmatprep.subr.mxu0 0.0
  %68 = vmatpush1.msra.mxu0 0.0
  %69 = vmatprep.subr.mxu0 0.0
  %70 = vmatpush1.msra.mxu0 0.0
  %71 = vmatprep.subr.mxu0 0.0
  %72 = vmatpush1.msra.mxu0 0.0
  %73 = vmatprep.subr.mxu0 0.0
  %74 = vmatpush1.msra.mxu0 0.0
  %75 = vmatprep.subr.mxu0 0.0
  %76 = vmatpush1.msra.mxu0 0.0
  %77 = vmatprep.subr.mxu0 0.0
  %78 = vmatpush1.msra.mxu0 0.0
  %79 = vmatprep.subr.mxu0 0.0
  %80 = vmatpush1.msra.mxu0 0.0
  %81 = vmatprep.subr.mxu0 0.0
  %82 = vmatpush1.msra.mxu0 0.0
  %83 = vmatprep.subr.mxu0 0.0
  %84 = vmatpush1.msra.mxu0 0.0
  %85 = vmatprep.subr.mxu0 0.0
  %86 = vmatpush1.msra.mxu0 0.0
  %87 = vmatprep.subr.mxu0 0.0
  %88 = vmatpush1.msra.mxu0 0.0
  %89 = vmatprep.subr.mxu0 0.0
  %90 = vmatpush1.msra.mxu0 0.0
  %91 = vmatprep.subr.mxu0 0.0
  %92 = vmatpush1.msra.mxu0 0.0
  %93 = vmatprep.subr.mxu0 0.0
  %94 = vmatpush1.msra.mxu0 0.0
  %95 = vmatprep.subr.mxu0 0.0
  %96 = vmatpush1.msra.mxu0 0.0
  %97 = vmatprep.subr.mxu0 0.0
  %98 = vmatpush1.msra.mxu0 0.0
  %99 = vmatprep.subr.mxu0 0.0
  %100 = vmatpush1.msra.mxu0 0.0
  %101 = vmatprep.mubr.f32.mxu0 0.0
  %102 = vmatmul.mubr.f32.gmra.mrb[0].mxu0 %v31
  %v103 = vpop.f32.mrb[0].mxu0
  %v104 = vadd.f32 %v27, %v103
  %v105 = vpop.f32.mrb[0].mxu0
  %106 = vdwg.mxu0
  %v107 = vmax.f32 %v104, 0.0
  %v108 = vld [vmem:[%s3] sm:$0xf]
  %v109 = vld [vmem:[%s4] sm:$0x1]
  %v111 = vlaneseq
  %v112 = vshrl.u32 %v111, 7
  %v113 = vsub.s32 0, %v112
  %v114 = vrot.slane %v109, %v113
  %v117 = vsel %vm29, %v107, 0
  %v120 = vsel %vm33, %v108, 0
  %122 = vmatprep.subr.mxu0 0.0
  %123 = vmatpush1.msra.mxu0 %v120
  %124 = vmatprep.subr.mxu0 0.0
  %125 = vmatpush1.msra.mxu0 0.0
  %126 = vmatprep.subr.mxu0 0.0
  %127 = vmatpush1.msra.mxu0 0.0
  %128 = vmatprep.subr.mxu0 0.0
  %129 = vmatpush1.msra.mxu0 0.0
  %130 = vmatprep.subr.mxu0 0.0
  %131 = vmatpush1.msra.mxu0 0.0
  %132 = vmatprep.subr.mxu0 0.0
  %133 = vmatpush1.msra.mxu0 0.0
  %134 = vmatprep.subr.mxu0 0.0
  %135 = vmatpush1.msra.mxu0 0.0
  %136 = vmatprep.subr.mxu0 0.0
  %137 = vmatpush1.msra.mxu0 0.0
  %138 = vmatprep.subr.mxu0 0.0
  %139 = vmatpush1.msra.mxu0 0.0
  %140 = vmatprep.subr.mxu0 0.0
  %141 = vmatpush1.msra.mxu0 0.0
  %142 = vmatprep.subr.mxu0 0.0
  %143 = vmatpush1.msra.mxu0 0.0
  %144 = vmatprep.subr.mxu0 0.0
  %145 = vmatpush1.msra.mxu0 0.0
  %146 = vmatprep.subr.mxu0 0.0
  %147 = vmatpush1.msra.mxu0 0.0
  %148 = vmatprep.subr.mxu0 0.0
  %149 = vmatpush1.msra.mxu0 0.0
  %150 = vmatprep.subr.mxu0 0.0
  %151 = vmatpush1.msra.mxu0 0.0
  %152 = vmatprep.subr.mxu0 0.0
  %153 = vmatpush1.msra.mxu0 0.0
  %154 = vmatprep.subr.mxu0 0.0
  %155 = vmatpush1.msra.mxu0 0.0
  %156 = vmatprep.subr.mxu0 0.0
  %157 = vmatpush1.msra.mxu0 0.0
  %158 = vmatprep.subr.mxu0 0.0
  %159 = vmatpush1.msra.mxu0 0.0
  %160 = vmatprep.subr.mxu0 0.0
  %161 = vmatpush1.msra.mxu0 0.0
  %162 = vmatprep.subr.mxu0 0.0
  %163 = vmatpush1.msra.mxu0 0.0
  %164 = vmatprep.subr.mxu0 0.0
  %165 = vmatpush1.msra.mxu0 0.0
  %166 = vmatprep.subr.mxu0 0.0
  %167 = vmatpush1.msra.mxu0 0.0
  %168 = vmatprep.subr.mxu0 0.0
  %169 = vmatpush1.msra.mxu0 0.0
  %170 = vmatprep.subr.mxu0 0.0
  %171 = vmatpush1.msra.mxu0 0.0
  %172 = vmatprep.subr.mxu0 0.0
  %173 = vmatpush1.msra.mxu0 0.0
  %174 = vmatprep.subr.mxu0 0.0
  %175 = vmatpush1.msra.mxu0 0.0
  %176 = vmatprep.subr.mxu0 0.0
  %177 = vmatpush1.msra.mxu0 0.0
  %178 = vmatprep.subr.mxu0 0.0
  %179 = vmatpush1.msra.mxu0 0.0
  %180 = vmatprep.subr.mxu0 0.0
  %181 = vmatpush1.msra.mxu0 0.0
  %182 = vmatprep.subr.mxu0 0.0
  %183 = vmatpush1.msra.mxu0 0.0
  %184 = vmatprep.subr.mxu0 0.0
  %185 = vmatpush1.msra.mxu0 0.0
  %186 = vmatprep.mubr.f32.mxu0 0.0
  %187 = vmatmul.mubr.f32.gmra.mrb[0].mxu0 %v117
  %v188 = vpop.f32.mrb[0].mxu0
  %v189 = vadd.f32 %v114, %v188
  %v190 = vpop.f32.mrb[0].mxu0
  %191 = vdwg.mxu0
  %vm192 = vcmask 25600
  %v193 = vsel %vm192, %v189, -inf
  %194 = vmax.xlane.f32.xlu0 %v193
  %v195 = vpop.xlane.xlu0 %194
  %v196 = vsub.f32 %v189, %v195
  %v197 = vmul.f32 %v196, 1.442695
  %v198 = vpow.pop %v197
  %v199 = vsel %vm192, %v198, 0.0
  %200 = vadd.xlane.f32.xlu0 %v199
  %v201 = vpop.xlane.xlu0 %200
  %v202 = vrcp.pop %v201
  %v203 = vmul.f32 %v198, %v202
  %204 = vst.msk [vmem:[%s5] sm:$0x3] %vm192, %v203
  // Predicated region
  $region22: #{_forward.2} parent=0 // pred_check
    _
  $region23: #{_forward.2} parent=0 // pred_check_branch
    %206 = sbr.rel (0) target = $region25
  $region24: #{_forward.2} parent=0 // pred_region
    _
  $region25: #{_forward.2} parent=0 // pred_fallthru
    _
  // Predicated region
  $region26: #{_forward.2} parent=0 // pred_check
    _
  $region27: #{_forward.2} parent=0 // pred_check_branch
    %208 = sbr.rel (0) target = $region29
  $region28: #{_forward.2} parent=0 // pred_region
    _
  $region29: #{_forward.2} parent=0 // pred_fallthru
    _

// kernel: _forward.3
$region0: #{_forward.3}
  #allocation0 [shape = 'u32[]', space=smem, size = 0x4, offset = 0x4, fixed_abs, tag = 'smem constant byte address 0x4 - core index']
  #allocation1 [shape = 'u32[144,128]{1,0:T(1,128)}', space=vmem, size = 0x12000, scoped, tag = 'internal scratch']
  #allocation2 [shape = 'f32[256,128]{1,0:T(8,128)}', space=vmem, size = 0x20000, scoped, tag = 'scratch operand']
  %s0 = inlined_call_operand.vmem [shape: f32[2,4], index: 0, kind: input, shape index: {}]
  %s1 = inlined_call_operand.vmem [shape: f32[2,256,128], index: 1, kind: input, shape index: {}]
  %s2 = inlined_call_operand.vmem [shape: f32[4,128,128], index: 2, kind: input, shape index: {}]
  %s3 = inlined_call_operand.vmem [shape: f32[4,1,128], index: 3, kind: input, shape index: {}]
  %s4 = inlined_call_operand.vmem [shape: f32[2,128,256], index: 4, kind: output, shape index: {}]
  %s5 = sld [smem:[#allocation0]]
  $region61: #{_forward.3} parent=0
    _
  %s7 = ssub.s32 1, %s5
  %s8 = scalar_select 0, %s7, %s5
  $region1: #{_forward.3} parent=0
    #allocation3 [shape = 'u8[1024]{0}', space=smem, size = 0x400, scoped, tag = 'input window, operand 0, single buffered']
    #allocation4 [shape = 's32[2]{0}', space=sflag, size = 0x8, scoped, tag = 'scoped memory for _forward.3']
    %9 = vsyncpa [#allocation4], 0
    loop: start=0, step=1, limit=4
    $region2: #{_forward.3} parent=1 // loop_pre_header
      _
    $region3: #{_forward.3} parent=1 // loop_header
      %s11 = sphi 0, %s15
      %p12 = scmp.ge.s32.totalorder %s11, 4
      %s18 = sphi 0, %s37
      %s19 = sphi 0, %s33
      %s20 = sphi 0, %s29
      %s21 = sphi 0, %s18
      %s22 = sphi 0, %s19
      %s23 = sphi 0, %s20
      %s24 = sphi 0, %s21
      %s25 = sphi 0, %s22
      %s26 = sphi 0, %s23
      %s38 = sphi 0, %s38
      %s40 = sphi 0, %s38
      %s41 = sphi 0, %s40
      %s55 = sphi 0, %s41
      %s65 = sphi 0, %s67
      %s68 = sphi 0, %s65
      %s69 = sphi 0, %s68
      %s85 = sphi 0, %s69
      %s91 = sphi 0, %s93
      %s94 = sphi 0, %s91
      %s95 = sphi 0, %s94
      %s111 = sphi 0, %s95
      %s115 = sphi 0, %s115
      %s117 = sphi 0, %s115
      %s118 = sphi 0, %s117
      %s132 = sphi 0, %s118
      %s140 = sphi 0, %s142
      %s143 = sphi 0, %s140
      %s144 = sphi 0, %s143
      %s160 = sphi 0, %s144
    $region4: #{_forward.3} parent=1 // loop_header_branch
      %14 = sbr.rel (%p12) target = $region8
    $region5: #{_forward.3} parent=1 // loop_body
      %s16 = ssub.s32 %s11, 1
      %s17 = ssub.s32 %s11, 2
      %s27 = sadd.s32 1, %s20
      %p28 = scmp.ge.s32.totalorder %s27, 1
      %s29 = scalar_select %p28, 0, %s27
      %s30 = sadd.s32 1, %s19
      %s31 = scalar_select %p28, %s30, %s19
      %p32 = scmp.ge.s32.totalorder %s31, 1
      %s33 = scalar_select %p32, 0, %s31
      %s34 = sadd.s32 1, %s18
      %s35 = scalar_select %p32, %s34, %s18
      %p36 = scmp.ge.s32.totalorder %s35, 2
      %s37 = scalar_select %p36, 0, %s35
      %s39 = sadd.s32 %s38, 1
      %p42 = scmp.eq.s32.totalorder %s11, 1
      %p43 = scmp.ne.s32.totalorder %s38, %s40
      %p44 = scmp.eq.s32.totalorder %s11, 0
      %p45 = por %p43, %p44
      %p46 = scmp.ne.s32.totalorder %s38, %s40
      %p47 = scmp.eq.s32.totalorder %s16, 1
      %p48 = por %p46, %p47
      %p49 = scmp.ne.s32.totalorder %s40, %s41
      %p50 = scmp.eq.s32.totalorder %s16, 0
      %p51 = por %p49, %p50
      %p52 = scmp.ne.s32.totalorder %s40, %s41
      %p53 = scmp.eq.s32.totalorder %s17, 1
      %p54 = por %p52, %p53
      %p56 = scmp.ne.s32.totalorder %s41, %s55
      %p57 = scmp.eq.s32.totalorder %s17, 0
      %p58 = por %p56, %p57
      %s59 = ssub.s32 %s18, %s37
      %s60 = ssub.s32 %s19, %s33
      %s61 = sor.u32 %s59, %s60
      %s62 = ssub.s32 %s20, %s29
      %s63 = sor.u32 %s61, %s62
      %p64 = scmp.eq.s32.totalorder %s63, 0
      %s66 = sadd.s32 %s65, 1
      %s67 = scalar_select %p64, %s65, %s66
      %p70 = pneg %p64
      %p71 = scmp.eq.s32.totalorder %s11, 1
      %p72 = por %p70, %p71
      %p73 = scmp.ne.s32.totalorder %s65, %s68
      %p74 = scmp.eq.s32.totalorder %s11, 0
      %p75 = por %p73, %p74
      %p76 = scmp.ne.s32.totalorder %s65, %s68
      %p77 = scmp.eq.s32.totalorder %s16, 1
      %p78 = por %p76, %p77
      %p79 = scmp.ne.s32.totalorder %s68, %s69
      %p80 = scmp.eq.s32.totalorder %s16, 0
      %p81 = por %p79, %p80
      %p82 = scmp.ne.s32.totalorder %s68, %s69
      %p83 = scmp.eq.s32.totalorder %s17, 1
      %p84 = por %p82, %p83
      %p86 = scmp.ne.s32.totalorder %s69, %s85
      %p87 = scmp.eq.s32.totalorder %s17, 0
      %p88 = por %p86, %p87
      %s89 = ssub.s32 %s20, %s29
      %p90 = scmp.eq.s32.totalorder %s89, 0
      %s92 = sadd.s32 %s91, 1
      %s93 = scalar_select %p90, %s91, %s92
      %p96 = pneg %p90
      %p97 = scmp.eq.s32.totalorder %s11, 1
      %p98 = por %p96, %p97
      %p99 = scmp.ne.s32.totalorder %s91, %s94
      %p100 = scmp.eq.s32.totalorder %s11, 0
      %p101 = por %p99, %p100
      %p102 = scmp.ne.s32.totalorder %s91, %s94
      %p103 = scmp.eq.s32.totalorder %s16, 1
      %p104 = por %p102, %p103
      %p105 = scmp.ne.s32.totalorder %s94, %s95
      %p106 = scmp.eq.s32.totalorder %s16, 0
      %p107 = por %p105, %p106
      %p108 = scmp.ne.s32.totalorder %s94, %s95
      %p109 = scmp.eq.s32.totalorder %s17, 1
      %p110 = por %p108, %p109
      %p112 = scmp.ne.s32.totalorder %s95, %s111
      %p113 = scmp.eq.s32.totalorder %s17, 0
      %p114 = por %p112, %p113
      %s116 = sadd.s32 %s115, 1
      %p119 = scmp.eq.s32.totalorder %s11, 1
      %p120 = scmp.ne.s32.totalorder %s115, %s117
      %p121 = scmp.eq.s32.totalorder %s11, 0
      %p122 = por %p120, %p121
      %p123 = scmp.ne.s32.totalorder %s115, %s117
      %p124 = scmp.eq.s32.totalorder %s16, 1
      %p125 = por %p123, %p124
      %p126 = scmp.ne.s32.totalorder %s117, %s118
      %p127 = scmp.eq.s32.totalorder %s16, 0
      %p128 = por %p126, %p127
      %p129 = scmp.ne.s32.totalorder %s117, %s118
      %p130 = scmp.eq.s32.totalorder %s17, 1
      %p131 = por %p129, %p130
      %p133 = scmp.ne.s32.totalorder %s118, %s132
      %p134 = scmp.eq.s32.totalorder %s17, 0
      %p135 = por %p133, %p134
      %s136 = ssub.s32 %s18, %s37
      %s137 = ssub.s32 %s19, %s33
      %s138 = sor.u32 %s136, %s137
      %p139 = scmp.eq.s32.totalorder %s138, 0
      %s141 = sadd.s32 %s140, 1
      %s142 = scalar_select %p139, %s140, %s141
      %p145 = pneg %p139
      %p146 = scmp.eq.s32.totalorder %s11, 1
      %p147 = por %p145, %p146
      %p148 = scmp.ne.s32.totalorder %s140, %s143
      %p149 = scmp.eq.s32.totalorder %s11, 0
      %p150 = por %p148, %p149
      %p151 = scmp.ne.s32.totalorder %s140, %s143
      %p152 = scmp.eq.s32.totalorder %s16, 1
      %p153 = por %p151, %p152
      %p154 = scmp.ne.s32.totalorder %s143, %s144
      %p155 = scmp.eq.s32.totalorder %s16, 0
      %p156 = por %p154, %p155
      %p157 = scmp.ne.s32.totalorder %s143, %s144
      %p158 = scmp.eq.s32.totalorder %s17, 1
      %p159 = por %p157, %p158
      %p161 = scmp.ne.s32.totalorder %s144, %s160
      %p162 = scmp.eq.s32.totalorder %s17, 0
      %p163 = por %p161, %p162
      %p164 = scmp.le.s32.totalorder 1, %s11
      %p165 = scmp.lt.s32.totalorder %s11, 3
      %p166 = pnand %p164, %p165
      %p167 = pneg %p166
      // Predicated region
      $region9: #{_forward.3} parent=5 // pred_check
        _
      $region10: #{_forward.3} parent=5 // pred_check_branch
        %169 = sbr.rel (%p166) target = $region12
      $region11: #{_forward.3} parent=5 // pred_region
        %s170 = ssub.s32 %s11, 1
        // Predicated region
        $region13: #{_forward.3} parent=11 // pred_check
          %p171 = pneg %p51
        $region14: #{_forward.3} parent=11 // pred_check_branch
          %173 = sbr.rel (%p171) target = $region16
        $region15: #{_forward.3} parent=11 // pred_region
          %s175 = ssub.s32 32, 32
          %176 = vsyncadd [#allocation4], %s175
          %s178 = sshll.u32 %s0, 4
          %s179 = int_to_ptr.vmem [resolvable:$true] %s178
          %181 = dma.vmem_to_smem %s179, 32, [#allocation3], [#allocation4]
        $region16: #{_forward.3} parent=11 // pred_fallthru
          _
        // Predicated region
        $region17: #{_forward.3} parent=11 // pred_check
          %p182 = pneg %p107
        $region18: #{_forward.3} parent=11 // pred_check_branch
          %184 = sbr.rel (%p182) target = $region20
        $region19: #{_forward.3} parent=11 // pred_region
          %s185 = smul.u32 16, %s23
          %p186 = scmp.lt.s32.totalorder %s185, 15
          %s187 = scalar_select %p186, %s185, 15
          %s188 = smul.addr %s187, 8
          %s189 = scalar_lea.vmem %s2, %s188
          %s190 = smul.u32 16, %s23
        $region20: #{_forward.3} parent=11 // pred_fallthru
          _
        // Predicated region
        $region21: #{_forward.3} parent=11 // pred_check
          %p191 = pneg %p128
        $region22: #{_forward.3} parent=11 // pred_check_branch
          %193 = sbr.rel (%p191) target = $region24
        $region23: #{_forward.3} parent=11 // pred_region
          _
        $region24: #{_forward.3} parent=11 // pred_fallthru
          _
      $region12: #{_forward.3} parent=5 // pred_fallthru
        _
      %p194 = scmp.lt.s32.totalorder %s11, 2
      // Predicated region
      $region25: #{_forward.3} parent=5 // pred_check
        %p195 = pneg %p194
      $region26: #{_forward.3} parent=5 // pred_check_branch
        %197 = sbr.rel (%p195) target = $region28
      $region27: #{_forward.3} parent=5 // pred_region
        // Predicated region
        $region29: #{_forward.3} parent=27 // pred_check
          %p198 = pneg %p75
        $region30: #{_forward.3} parent=27 // pred_check_branch
          %200 = sbr.rel (%p198) target = $region32
        $region31: #{_forward.3} parent=27 // pred_region
          %s201 = smul.u32 32, %s19
          %p202 = scmp.lt.s32.totalorder %s18, 1
          %s203 = scalar_select %p202, %s18, 1
          %p204 = scmp.lt.s32.totalorder %s201, 31
          %s205 = scalar_select %p204, %s201, 31
          %p206 = scmp.lt.s32.totalorder %s20, 0
          %s207 = scalar_select %p206, %s20, 0
          %s208 = sadd.s32 %s207, %s205
          %s209 = smul.addr %s203, 32
          %s210 = sadd.s32 %s208, %s209
          %s211 = smul.addr %s210, 8
          %s212 = scalar_lea.vmem %s1, %s211
          %s213 = smul.u32 32, %s19
        $region32: #{_forward.3} parent=27 // pred_fallthru
          _
      $region28: #{_forward.3} parent=5 // pred_fallthru
        _
      %p214 = scmp.le.s32.totalorder 1, %s11
      %p215 = scmp.lt.s32.totalorder %s11, 3
      %p216 = pnand %p214, %p215
      %p217 = pneg %p216
      // Predicated region
      $region33: #{_forward.3} parent=5 // pred_check
        _
      $region34: #{_forward.3} parent=5 // pred_check_branch
        %219 = sbr.rel (%p216) target = $region36
      $region35: #{_forward.3} parent=5 // pred_region
        %s220 = ssub.s32 %s11, 1
        // Predicated region
        $region37: #{_forward.3} parent=35 // pred_check
          %p221 = pneg %p51
        $region38: #{_forward.3} parent=35 // pred_check_branch
          %223 = sbr.rel (%p221) target = $region40
        $region39: #{_forward.3} parent=35 // pred_region
          %224 = dma.done [#allocation4], 32
        $region40: #{_forward.3} parent=35 // pred_fallthru
          _
        %225 = sfence
        %p226 = pneg %p51
        %p227 = pneg %p48
        %s228 = smul.u32 32, %s22
        %p229 = scmp.lt.s32.totalorder %s21, 1
        %s230 = scalar_select %p229, %s21, 1
        %p231 = scmp.lt.s32.totalorder %s228, 31
        %s232 = scalar_select %p231, %s228, 31
        %p233 = scmp.lt.s32.totalorder %s23, 0
        %s234 = scalar_select %p233, %s23, 0
        %s235 = sadd.s32 %s234, %s232
        %s236 = smul.addr %s230, 32
        %s237 = sadd.s32 %s235, %s236
        %s238 = smul.addr %s237, 8
        %s239 = scalar_lea.vmem %s1, %s238
        %p240 = pneg %p81
        %p241 = pneg %p78
        %s242 = smul.u32 16, %s23
        %p243 = scmp.lt.s32.totalorder %s242, 15
        %s244 = scalar_select %p243, %s242, 15
        %s245 = smul.addr %s244, 8
        %s246 = scalar_lea.vmem %s2, %s245
        %p247 = pneg %p107
        %p248 = pneg %p104
        %p249 = pneg %p128
        %p250 = pneg %p125
        %p251 = pneg %p156
        %p252 = pneg %p153
        %s253 = smul.u32 2, %s22
        %p254 = scmp.lt.s32.totalorder %s21, 1
        %s255 = scalar_select %p254, %s21, 1
        %p256 = scmp.lt.s32.totalorder %s253, 1
        %s257 = scalar_select %p256, %s253, 1
        %s258 = smul.addr %s255, 32
        %s259 = sadd.s32 %s257, %s258
        %s260 = smul.addr %s259, 8
        %s261 = scalar_lea.vmem %s4, %s260
        %s262 = smul.u32 32, %s22
        %p263 = scmp.lt.s32.totalorder %s21, 1
        %s264 = scalar_select %p263, %s21, 1
        %p265 = scmp.lt.s32.totalorder %s262, 31
        %s266 = scalar_select %p265, %s262, 31
        %p267 = scmp.lt.s32.totalorder %s23, 0
        %s268 = scalar_select %p267, %s23, 0
        %s269 = sadd.s32 %s268, %s266
        %s270 = smul.addr %s264, 32
        %s271 = sadd.s32 %s269, %s270
        %s272 = smul.addr %s271, 8
        %s273 = scalar_lea.vmem %s1, %s272
        %s274 = smul.u32 32, %s22
        %s275 = smul.u32 16, %s23
        %p276 = scmp.lt.s32.totalorder %s275, 15
        %s277 = scalar_select %p276, %s275, 15
        %s278 = smul.addr %s277, 8
        %s279 = scalar_lea.vmem %s2, %s278
        %s280 = smul.u32 16, %s23
        %s281 = smul.u32 2, %s22
        %p282 = scmp.lt.s32.totalorder %s21, 1
        %s283 = scalar_select %p282, %s21, 1
        %p284 = scmp.lt.s32.totalorder %s281, 1
        %s285 = scalar_select %p284, %s281, 1
        %s286 = smul.addr %s283, 32
        %s287 = sadd.s32 %s285, %s286
        %s288 = smul.addr %s287, 8
        %s289 = scalar_lea.vmem %s4, %s288
        %s290 = smul.u32 2, %s22
        %p291 = scmp.eq.s32.totalorder %s23, 0
        // Predicated region
        $region41: #{_forward.3} parent=35 // pred_check
          %p292 = pneg %p291
        $region42: #{_forward.3} parent=35 // pred_check_branch
          %294 = sbr.rel (%p292) target = $region44
        $region43: #{_forward.3} parent=35 // pred_region
          %295 = vst [vmem:[#allocation2] sm:$0xff] 0.0
          %296 = vst [vmem:[#allocation2 + $0x8] sm:$0xff] 0.0
          %297 = vst [vmem:[#allocation2 + $0x10] sm:$0xff] 0.0
          %298 = vst [vmem:[#allocation2 + $0x18] sm:$0xff] 0.0
          %299 = vst [vmem:[#allocation2 + $0x20] sm:$0xff] 0.0
          %300 = vst [vmem:[#allocation2 + $0x28] sm:$0xff] 0.0
          %301 = vst [vmem:[#allocation2 + $0x30] sm:$0xff] 0.0
          %302 = vst [vmem:[#allocation2 + $0x38] sm:$0xff] 0.0
          %303 = vst [vmem:[#allocation2 + $0x40] sm:$0xff] 0.0
          %304 = vst [vmem:[#allocation2 + $0x48] sm:$0xff] 0.0
          %305 = vst [vmem:[#allocation2 + $0x50] sm:$0xff] 0.0
          %306 = vst [vmem:[#allocation2 + $0x58] sm:$0xff] 0.0
          %307 = vst [vmem:[#allocation2 + $0x60] sm:$0xff] 0.0
          %308 = vst [vmem:[#allocation2 + $0x68] sm:$0xff] 0.0
          %309 = vst [vmem:[#allocation2 + $0x70] sm:$0xff] 0.0
          %310 = vst [vmem:[#allocation2 + $0x78] sm:$0xff] 0.0
          %311 = vst [vmem:[#allocation2 + $0x80] sm:$0xff] 0.0
          %312 = vst [vmem:[#allocation2 + $0x88] sm:$0xff] 0.0
          %313 = vst [vmem:[#allocation2 + $0x90] sm:$0xff] 0.0
          %314 = vst [vmem:[#allocation2 + $0x98] sm:$0xff] 0.0
          %315 = vst [vmem:[#allocation2 + $0xa0] sm:$0xff] 0.0
          %316 = vst [vmem:[#allocation2 + $0xa8] sm:$0xff] 0.0
          %317 = vst [vmem:[#allocation2 + $0xb0] sm:$0xff] 0.0
          %318 = vst [vmem:[#allocation2 + $0xb8] sm:$0xff] 0.0
          %319 = vst [vmem:[#allocation2 + $0xc0] sm:$0xff] 0.0
          %320 = vst [vmem:[#allocation2 + $0xc8] sm:$0xff] 0.0
          %321 = vst [vmem:[#allocation2 + $0xd0] sm:$0xff] 0.0
          %322 = vst [vmem:[#allocation2 + $0xd8] sm:$0xff] 0.0
          %323 = vst [vmem:[#allocation2 + $0xe0] sm:$0xff] 0.0
          %324 = vst [vmem:[#allocation2 + $0xe8] sm:$0xff] 0.0
          %325 = vst [vmem:[#allocation2 + $0xf0] sm:$0xff] 0.0
          %326 = vst [vmem:[#allocation2 + $0xf8] sm:$0xff] 0.0
        $region44: #{_forward.3} parent=35 // pred_fallthru
          _
        %s327 = smul.u32 %s21, 128
        %s328 = sld [smem:[#allocation3 + %s327]]
        %v329 = vld [vmem:[%s279] sm:$0xff]
        %v330 = vld [vmem:[%s279 + $0x8] sm:$0xff]
        %v331 = vld [vmem:[%s279 + $0x10] sm:$0xff]
        %v332 = vld [vmem:[%s279 + $0x18] sm:$0xff]
        %v333 = vld [vmem:[%s279 + $0x20] sm:$0xff]
        %v334 = vld [vmem:[%s279 + $0x28] sm:$0xff]
        %v335 = vld [vmem:[%s279 + $0x30] sm:$0xff]
        %v336 = vld [vmem:[%s279 + $0x38] sm:$0xff]
        %v337 = vld [vmem:[%s279 + $0x40] sm:$0xff]
        %v338 = vld [vmem:[%s279 + $0x48] sm:$0xff]
        %v339 = vld [vmem:[%s279 + $0x50] sm:$0xff]
        %v340 = vld [vmem:[%s279 + $0x58] sm:$0xff]
        %v341 = vld [vmem:[%s279 + $0x60] sm:$0xff]
        %v342 = vld [vmem:[%s279 + $0x68] sm:$0xff]
        %v343 = vld [vmem:[%s279 + $0x70] sm:$0xff]
        %v344 = vld [vmem:[%s279 + $0x78] sm:$0xff]
        %v345 = vstv %s328
        %v346 = vmul.f32 %v345, %v329
        %v347 = vmul.f32 %v345, %v330
        %v348 = vmul.f32 %v345, %v331
        %v349 = vmul.f32 %v345, %v332
        %v350 = vmul.f32 %v345, %v333
        %v351 = vmul.f32 %v345, %v334
        %v352 = vmul.f32 %v345, %v335
        %v353 = vmul.f32 %v345, %v336
        %v354 = vmul.f32 %v345, %v337
        %v355 = vmul.f32 %v345, %v338
        %v356 = vmul.f32 %v345, %v339
        %v357 = vmul.f32 %v345, %v340
        %v358 = vmul.f32 %v345, %v341
        %v359 = vmul.f32 %v345, %v342
        %v360 = vmul.f32 %v345, %v343
        %v361 = vmul.f32 %v345, %v344
        %s362 = sadd.s32 %s327, 1
        %s363 = sld [smem:[#allocation3 + %s362]]
        %s364 = scalar_lea.vmem %s279, 128
        %v365 = vld [vmem:[%s364] sm:$0xff]
        %v366 = vld [vmem:[%s364 + $0x8] sm:$0xff]
        %v367 = vld [vmem:[%s364 + $0x10] sm:$0xff]
        %v368 = vld [vmem:[%s364 + $0x18] sm:$0xff]
        %v369 = vld [vmem:[%s364 + $0x20] sm:$0xff]
        %v370 = vld [vmem:[%s364 + $0x28] sm:$0xff]
        %v371 = vld [vmem:[%s364 + $0x30] sm:$0xff]
        %v372 = vld [vmem:[%s364 + $0x38] sm:$0xff]
        %v373 = vld [vmem:[%s364 + $0x40] sm:$0xff]
        %v374 = vld [vmem:[%s364 + $0x48] sm:$0xff]
        %v375 = vld [vmem:[%s364 + $0x50] sm:$0xff]
        %v376 = vld [vmem:[%s364 + $0x58] sm:$0xff]
        %v377 = vld [vmem:[%s364 + $0x60] sm:$0xff]
        %v378 = vld [vmem:[%s364 + $0x68] sm:$0xff]
        %v379 = vld [vmem:[%s364 + $0x70] sm:$0xff]
        %v380 = vld [vmem:[%s364 + $0x78] sm:$0xff]
        %v381 = vstv %s363
        %v382 = vmul.f32 %v381, %v365
        %v383 = vmul.f32 %v381, %v366
        %v384 = vmul.f32 %v381, %v367
        %v385 = vmul.f32 %v381, %v368
        %v386 = vmul.f32 %v381, %v369
        %v387 = vmul.f32 %v381, %v370
        %v388 = vmul.f32 %v381, %v371
        %v389 = vmul.f32 %v381, %v372
        %v390 = vmul.f32 %v381, %v373
        %v391 = vmul.f32 %v381, %v374
        %v392 = vmul.f32 %v381, %v375
        %v393 = vmul.f32 %v381, %v376
        %v394 = vmul.f32 %v381, %v377
        %v395 = vmul.f32 %v381, %v378
        %v396 = vmul.f32 %v381, %v379
        %v397 = vmul.f32 %v381, %v380
        %v398 = vadd.f32 %v346, %v382
        %v399 = vadd.f32 %v347, %v383
        %v400 = vadd.f32 %v348, %v384
        %v401 = vadd.f32 %v349, %v385
        %v402 = vadd.f32 %v350, %v386
        %v403 = vadd.f32 %v351, %v387
        %v404 = vadd.f32 %v352, %v388
        %v405 = vadd.f32 %v353, %v389
        %v406 = vadd.f32 %v354, %v390
        %v407 = vadd.f32 %v355, %v391
        %v408 = vadd.f32 %v356, %v392
        %v409 = vadd.f32 %v357, %v393
        %v410 = vadd.f32 %v358, %v394
        %v411 = vadd.f32 %v359, %v395
        %v412 = vadd.f32 %v360, %v396
        %v413 = vadd.f32 %v361, %v397
        %s414 = sadd.s32 %s327, 2
        %s415 = sld [smem:[#allocation3 + %s414]]
        %s416 = scalar_lea.vmem %s279, 256
        %v417 = vld [vmem:[%s416] sm:$0xff]
        %v418 = vld [vmem:[%s416 + $0x8] sm:$0xff]
        %v419 = vld [vmem:[%s416 + $0x10] sm:$0xff]
        %v420 = vld [vmem:[%s416 + $0x18] sm:$0xff]
        %v421 = vld [vmem:[%s416 + $0x20] sm:$0xff]
        %v422 = vld [vmem:[%s416 + $0x28] sm:$0xff]
        %v423 = vld [vmem:[%s416 + $0x30] sm:$0xff]
        %v424 = vld [vmem:[%s416 + $0x38] sm:$0xff]
        %v425 = vld [vmem:[%s416 + $0x40] sm:$0xff]
        %v426 = vld [vmem:[%s416 + $0x48] sm:$0xff]
        %v427 = vld [vmem:[%s416 + $0x50] sm:$0xff]
        %v428 = vld [vmem:[%s416 + $0x58] sm:$0xff]
        %v429 = vld [vmem:[%s416 + $0x60] sm:$0xff]
        %v430 = vld [vmem:[%s416 + $0x68] sm:$0xff]
        %v431 = vld [vmem:[%s416 + $0x70] sm:$0xff]
        %v432 = vld [vmem:[%s416 + $0x78] sm:$0xff]
        %v433 = vstv %s415
        %v434 = vmul.f32 %v433, %v417
        %v435 = vmul.f32 %v433, %v418
        %v436 = vmul.f32 %v433, %v419
        %v437 = vmul.f32 %v433, %v420
        %v438 = vmul.f32 %v433, %v421
        %v439 = vmul.f32 %v433, %v422
        %v440 = vmul.f32 %v433, %v423
        %v441 = vmul.f32 %v433, %v424
        %v442 = vmul.f32 %v433, %v425
        %v443 = vmul.f32 %v433, %v426
        %v444 = vmul.f32 %v433, %v427
        %v445 = vmul.f32 %v433, %v428
        %v446 = vmul.f32 %v433, %v429
        %v447 = vmul.f32 %v433, %v430
        %v448 = vmul.f32 %v433, %v431
        %v449 = vmul.f32 %v433, %v432
        %v450 = vadd.f32 %v398, %v434
        %v451 = vadd.f32 %v399, %v435
        %v452 = vadd.f32 %v400, %v436
        %v453 = vadd.f32 %v401, %v437
        %v454 = vadd.f32 %v402, %v438
        %v455 = vadd.f32 %v403, %v439
        %v456 = vadd.f32 %v404, %v440
        %v457 = vadd.f32 %v405, %v441
        %v458 = vadd.f32 %v406, %v442
        %v459 = vadd.f32 %v407, %v443
        %v460 = vadd.f32 %v408, %v444
        %v461 = vadd.f32 %v409, %v445
        %v462 = vadd.f32 %v410, %v446
        %v463 = vadd.f32 %v411, %v447
        %v464 = vadd.f32 %v412, %v448
        %v465 = vadd.f32 %v413, %v449
        %s466 = sadd.s32 %s327, 3
        %s467 = sld [smem:[#allocation3 + %s466]]
        %s468 = scalar_lea.vmem %s279, 384
        %v469 = vld [vmem:[%s468] sm:$0xff]
        %v470 = vld [vmem:[%s468 + $0x8] sm:$0xff]
        %v471 = vld [vmem:[%s468 + $0x10] sm:$0xff]
        %v472 = vld [vmem:[%s468 + $0x18] sm:$0xff]
        %v473 = vld [vmem:[%s468 + $0x20] sm:$0xff]
        %v474 = vld [vmem:[%s468 + $0x28] sm:$0xff]
        %v475 = vld [vmem:[%s468 + $0x30] sm:$0xff]
        %v476 = vld [vmem:[%s468 + $0x38] sm:$0xff]
        %v477 = vld [vmem:[%s468 + $0x40] sm:$0xff]
        %v478 = vld [vmem:[%s468 + $0x48] sm:$0xff]
        %v479 = vld [vmem:[%s468 + $0x50] sm:$0xff]
        %v480 = vld [vmem:[%s468 + $0x58] sm:$0xff]
        %v481 = vld [vmem:[%s468 + $0x60] sm:$0xff]
        %v482 = vld [vmem:[%s468 + $0x68] sm:$0xff]
        %v483 = vld [vmem:[%s468 + $0x70] sm:$0xff]
        %v484 = vld [vmem:[%s468 + $0x78] sm:$0xff]
        %v485 = vstv %s467
        %v486 = vmul.f32 %v485, %v469
        %v487 = vmul.f32 %v485, %v470
        %v488 = vmul.f32 %v485, %v471
        %v489 = vmul.f32 %v485, %v472
        %v490 = vmul.f32 %v485, %v473
        %v491 = vmul.f32 %v485, %v474
        %v492 = vmul.f32 %v485, %v475
        %v493 = vmul.f32 %v485, %v476
        %v494 = vmul.f32 %v485, %v477
        %v495 = vmul.f32 %v485, %v478
        %v496 = vmul.f32 %v485, %v479
        %v497 = vmul.f32 %v485, %v480
        %v498 = vmul.f32 %v485, %v481
        %v499 = vmul.f32 %v485, %v482
        %v500 = vmul.f32 %v485, %v483
        %v501 = vmul.f32 %v485, %v484
        %v502 = vadd.f32 %v450, %v486
        %v503 = vadd.f32 %v451, %v487
        %v504 = vadd.f32 %v452, %v488
        %v505 = vadd.f32 %v453, %v489
        %v506 = vadd.f32 %v454, %v490
        %v507 = vadd.f32 %v455, %v491
        %v508 = vadd.f32 %v456, %v492
        %v509 = vadd.f32 %v457, %v493
        %v510 = vadd.f32 %v458, %v494
        %v511 = vadd.f32 %v459, %v495
        %v512 = vadd.f32 %v460, %v496
        %v513 = vadd.f32 %v461, %v497
        %v514 = vadd.f32 %v462, %v498
        %v515 = vadd.f32 %v463, %v499
        %v516 = vadd.f32 %v464, %v500
        %v517 = vadd.f32 %v465, %v501
        %v518 = vld [vmem:[#allocation2] sm:$0xff]
        %v519 = vld [vmem:[#allocation2 + $0x8] sm:$0xff]
        %v520 = vld [vmem:[#allocation2 + $0x10] sm:$0xff]
        %v521 = vld [vmem:[#allocation2 + $0x18] sm:$0xff]
        %v522 = vld [vmem:[#allocation2 + $0x20] sm:$0xff]
        %v523 = vld [vmem:[#allocation2 + $0x28] sm:$0xff]
        %v524 = vld [vmem:[#allocation2 + $0x30] sm:$0xff]
        %v525 = vld [vmem:[#allocation2 + $0x38] sm:$0xff]
        %v526 = vld [vmem:[#allocation2 + $0x40] sm:$0xff]
        %v527 = vld [vmem:[#allocation2 + $0x48] sm:$0xff]
        %v528 = vld [vmem:[#allocation2 + $0x50] sm:$0xff]
        %v529 = vld [vmem:[#allocation2 + $0x58] sm:$0xff]
        %v530 = vld [vmem:[#allocation2 + $0x60] sm:$0xff]
        %v531 = vld [vmem:[#allocation2 + $0x68] sm:$0xff]
        %v532 = vld [vmem:[#allocation2 + $0x70] sm:$0xff]
        %v533 = vld [vmem:[#allocation2 + $0x78] sm:$0xff]
        %v534 = vld [vmem:[#allocation2 + $0x80] sm:$0xff]
        %v535 = vld [vmem:[#allocation2 + $0x88] sm:$0xff]
        %v536 = vld [vmem:[#allocation2 + $0x90] sm:$0xff]
        %v537 = vld [vmem:[#allocation2 + $0x98] sm:$0xff]
        %v538 = vld [vmem:[#allocation2 + $0xa0] sm:$0xff]
        %v539 = vld [vmem:[#allocation2 + $0xa8] sm:$0xff]
        %v540 = vld [vmem:[#allocation2 + $0xb0] sm:$0xff]
        %v541 = vld [vmem:[#allocation2 + $0xb8] sm:$0xff]
        %v542 = vld [vmem:[#allocation2 + $0xc0] sm:$0xff]
        %v543 = vld [vmem:[#allocation2 + $0xc8] sm:$0xff]
        %v544 = vld [vmem:[#allocation2 + $0xd0] sm:$0xff]
        %v545 = vld [vmem:[#allocation2 + $0xd8] sm:$0xff]
        %v546 = vld [vmem:[#allocation2 + $0xe0] sm:$0xff]
        %v547 = vld [vmem:[#allocation2 + $0xe8] sm:$0xff]
        %v548 = vld [vmem:[#allocation2 + $0xf0] sm:$0xff]
        %v549 = vld [vmem:[#allocation2 + $0xf8] sm:$0xff]
        %v550 = vld [vmem:[%s273] sm:$0xff]
        %v551 = vld [vmem:[%s273 + $0x8] sm:$0xff]
        %v552 = vld [vmem:[%s273 + $0x10] sm:$0xff]
        %v553 = vld [vmem:[%s273 + $0x18] sm:$0xff]
        %v554 = vld [vmem:[%s273 + $0x20] sm:$0xff]
        %v555 = vld [vmem:[%s273 + $0x28] sm:$0xff]
        %v556 = vld [vmem:[%s273 + $0x30] sm:$0xff]
        %v557 = vld [vmem:[%s273 + $0x38] sm:$0xff]
        %v558 = vld [vmem:[%s273 + $0x40] sm:$0xff]
        %v559 = vld [vmem:[%s273 + $0x48] sm:$0xff]
        %v560 = vld [vmem:[%s273 + $0x50] sm:$0xff]
        %v561 = vld [vmem:[%s273 + $0x58] sm:$0xff]
        %v562 = vld [vmem:[%s273 + $0x60] sm:$0xff]
        %v563 = vld [vmem:[%s273 + $0x68] sm:$0xff]
        %v564 = vld [vmem:[%s273 + $0x70] sm:$0xff]
        %v565 = vld [vmem:[%s273 + $0x78] sm:$0xff]
        %v566 = vld [vmem:[%s273 + $0x80] sm:$0xff]
        %v567 = vld [vmem:[%s273 + $0x88] sm:$0xff]
        %v568 = vld [vmem:[%s273 + $0x90] sm:$0xff]
        %v569 = vld [vmem:[%s273 + $0x98] sm:$0xff]
        %v570 = vld [vmem:[%s273 + $0xa0] sm:$0xff]
        %v571 = vld [vmem:[%s273 + $0xa8] sm:$0xff]
        %v572 = vld [vmem:[%s273 + $0xb0] sm:$0xff]
        %v573 = vld [vmem:[%s273 + $0xb8] sm:$0xff]
        %v574 = vld [vmem:[%s273 + $0xc0] sm:$0xff]
        %v575 = vld [vmem:[%s273 + $0xc8] sm:$0xff]
        %v576 = vld [vmem:[%s273 + $0xd0] sm:$0xff]
        %v577 = vld [vmem:[%s273 + $0xd8] sm:$0xff]
        %v578 = vld [vmem:[%s273 + $0xe0] sm:$0xff]
        %v579 = vld [vmem:[%s273 + $0xe8] sm:$0xff]
        %v580 = vld [vmem:[%s273 + $0xf0] sm:$0xff]
        %v581 = vld [vmem:[%s273 + $0xf8] sm:$0xff]
        %582 = vmatprep.subr.mxu0 0.0
        %583 = vmatpush1.msra.mxu0 %v502
        %584 = vmatprep.subr.mxu0 0.0
        %585 = vmatpush1.msra.mxu0 %v503
        %586 = vmatprep.subr.mxu0 0.0
        %587 = vmatpush1.msra.mxu0 %v504
        %588 = vmatprep.subr.mxu0 0.0
        %589 = vmatpush1.msra.mxu0 %v505
        %590 = vmatprep.subr.mxu0 0.0
        %591 = vmatpush1.msra.mxu0 %v506
        %592 = vmatprep.subr.mxu0 0.0
        %593 = vmatpush1.msra.mxu0 %v507
        %594 = vmatprep.subr.mxu0 0.0
        %595 = vmatpush1.msra.mxu0 %v508
        %596 = vmatprep.subr.mxu0 0.0
        %597 = vmatpush1.msra.mxu0 %v509
        %598 = vmatprep.subr.mxu0 0.0
        %599 = vmatpush1.msra.mxu0 %v510
        %600 = vmatprep.subr.mxu0 0.0
        %601 = vmatpush1.msra.mxu0 %v511
        %602 = vmatprep.subr.mxu0 0.0
        %603 = vmatpush1.msra.mxu0 %v512
        %604 = vmatprep.subr.mxu0 0.0
        %605 = vmatpush1.msra.mxu0 %v513
        %606 = vmatprep.subr.mxu0 0.0
        %607 = vmatpush1.msra.mxu0 %v514
        %608 = vmatprep.subr.mxu0 0.0
        %609 = vmatpush1.msra.mxu0 %v515
        %610 = vmatprep.subr.mxu0 0.0
        %611 = vmatpush1.msra.mxu0 %v516
        %612 = vmatprep.subr.mxu0 0.0
        %613 = vmatpush1.msra.mxu0 %v517
        %614 = vmatprep.subr.mxu0 0.0
        %615 = vmatpush1.msra.mxu0 0.0
        %616 = vmatprep.subr.mxu0 0.0
        %617 = vmatpush1.msra.mxu0 0.0
        %618 = vmatprep.subr.mxu0 0.0
        %619 = vmatpush1.msra.mxu0 0.0
        %620 = vmatprep.subr.mxu0 0.0
        %621 = vmatpush1.msra.mxu0 0.0
        %622 = vmatprep.subr.mxu0 0.0
        %623 = vmatpush1.msra.mxu0 0.0
        %624 = vmatprep.subr.mxu0 0.0
        %625 = vmatpush1.msra.mxu0 0.0
        %626 = vmatprep.subr.mxu0 0.0
        %627 = vmatpush1.msra.mxu0 0.0
        %628 = vmatprep.subr.mxu0 0.0
        %629 = vmatpush1.msra.mxu0 0.0
        %630 = vmatprep.subr.mxu0 0.0
        %631 = vmatpush1.msra.mxu0 0.0
        %632 = vmatprep.subr.mxu0 0.0
        %633 = vmatpush1.msra.mxu0 0.0
        %634 = vmatprep.subr.mxu0 0.0
        %635 = vmatpush1.msra.mxu0 0.0
        %636 = vmatprep.subr.mxu0 0.0
        %637 = vmatpush1.msra.mxu0 0.0
        %638 = vmatprep.subr.mxu0 0.0
        %639 = vmatpush1.msra.mxu0 0.0
        %640 = vmatprep.subr.mxu0 0.0
        %641 = vmatpush1.msra.mxu0 0.0
        %642 = vmatprep.subr.mxu0 0.0
        %643 = vmatpush1.msra.mxu0 0.0
        %644 = vmatprep.subr.mxu0 0.0
        %645 = vmatpush1.msra.mxu0 0.0
        %646 = vmatprep.mubr.f32.mxu0 0.0
        %647 = vmatmul.mubr.f32.gmra.mrb[0].mxu0 %v550
        %v648 = vpop.f32.mrb[0].mxu0
        %v649 = vadd.f32 0.0, %v648
        %v650 = vpop.f32.mrb[0].mxu0
        %651 = vmatprep.mubr.f32.mxu0 0.0
        %652 = vmatmul.mubr.f32.gmra.mrb[0].mxu0 %v551
        %v653 = vpop.f32.mrb[0].mxu0
        %v654 = vadd.f32 0.0, %v653
        %v655 = vpop.f32.mrb[0].mxu0
        %656 = vmatprep.mubr.f32.mxu0 0.0
        %657 = vmatmul.mubr.f32.gmra.mrb[0].mxu0 %v552
        %v658 = vpop.f32.mrb[0].mxu0
        %v659 = vadd.f32 0.0, %v658
        %v660 = vpop.f32.mrb[0].mxu0
        %661 = vmatprep.mubr.f32.mxu0 0.0
        %662 = vmatmul.mubr.f32.gmra.mrb[0].mxu0 %v553
        %v663 = vpop.f32.mrb[0].mxu0
        %v664 = vadd.f32 0.0, %v663
        %v665 = vpop.f32.mrb[0].mxu0
        %666 = vmatprep.mubr.f32.mxu0 0.0
        %667 = vmatmul.mubr.f32.gmra.mrb[0].mxu0 %v554
        %v668 = vpop.f32.mrb[0].mxu0
        %v669 = vadd.f32 0.0, %v668
        %v670 = vpop.f32.mrb[0].mxu0
        %671 = vmatprep.mubr.f32.mxu0 0.0
        %672 = vmatmul.mubr.f32.gmra.mrb[0].mxu0 %v555
        %v673 = vpop.f32.mrb[0].mxu0
        %v674 = vadd.f32 0.0, %v673
        %v675 = vpop.f32.mrb[0].mxu0
        %676 = vmatprep.mubr.f32.mxu0 0.0
        %677 = vmatmul.mubr.f32.gmra.mrb[0].mxu0 %v556
        %v678 = vpop.f32.mrb[0].mxu0
        %v679 = vadd.f32 0.0, %v678
        %v680 = vpop.f32.mrb[0].mxu0
        %681 = vmatprep.mubr.f32.mxu0 0.0
        %682 = vmatmul.mubr.f32.gmra.mrb[0].mxu0 %v557
        %v683 = vpop.f32.mrb[0].mxu0
        %v684 = vadd.f32 0.0, %v683
        %v685 = vpop.f32.mrb[0].mxu0
        %686 = vmatprep.mubr.f32.mxu0 0.0
        %687 = vmatmul.mubr.f32.gmra.mrb[0].mxu0 %v558
        %v688 = vpop.f32.mrb[0].mxu0
        %v689 = vadd.f32 0.0, %v688
        %v690 = vpop.f32.mrb[0].mxu0
        %691 = vmatprep.mubr.f32.mxu0 0.0
        %692 = vmatmul.mubr.f32.gmra.mrb[0].mxu0 %v559
        %v693 = vpop.f32.mrb[0].mxu0
        %v694 = vadd.f32 0.0, %v693
        %v695 = vpop.f32.mrb[0].mxu0
        %696 = vmatprep.mubr.f32.mxu0 0.0
        %697 = vmatmul.mubr.f32.gmra.mrb[0].mxu0 %v560
        %v698 = vpop.f32.mrb[0].mxu0
        %v699 = vadd.f32 0.0, %v698
        %v700 = vpop.f32.mrb[0].mxu0
        %701 = vmatprep.mubr.f32.mxu0 0.0
        %702 = vmatmul.mubr.f32.gmra.mrb[0].mxu0 %v561
        %v703 = vpop.f32.mrb[0].mxu0
        %v704 = vadd.f32 0.0, %v703
        %v705 = vpop.f32.mrb[0].mxu0
        %706 = vmatprep.mubr.f32.mxu0 0.0
        %707 = vmatmul.mubr.f32.gmra.mrb[0].mxu0 %v562
        %v708 = vpop.f32.mrb[0].mxu0
        %v709 = vadd.f32 0.0, %v708
        %v710 = vpop.f32.mrb[0].mxu0
        %711 = vmatprep.mubr.f32.mxu0 0.0
        %712 = vmatmul.mubr.f32.gmra.mrb[0].mxu0 %v563
        %v713 = vpop.f32.mrb[0].mxu0
        %v714 = vadd.f32 0.0, %v713
        %v715 = vpop.f32.mrb[0].mxu0
        %716 = vmatprep.mubr.f32.mxu0 0.0
        %717 = vmatmul.mubr.f32.gmra.mrb[0].mxu0 %v564
        %v718 = vpop.f32.mrb[0].mxu0
        %v719 = vadd.f32 0.0, %v718
        %v720 = vpop.f32.mrb[0].mxu0
        %721 = vmatprep.mubr.f32.mxu0 0.0
        %722 = vmatmul.mubr.f32.gmra.mrb[0].mxu0 %v565
        %v723 = vpop.f32.mrb[0].mxu0
        %v724 = vadd.f32 0.0, %v723
        %v725 = vpop.f32.mrb[0].mxu0
        %726 = vmatprep.mubr.f32.mxu0 0.0
        %727 = vmatmul.mubr.f32.gmra.mrb[0].mxu0 %v566
        %v728 = vpop.f32.mrb[0].mxu0
        %v729 = vadd.f32 0.0, %v728
        %v730 = vpop.f32.mrb[0].mxu0
        %731 = vmatprep.mubr.f32.mxu0 0.0
        %732 = vmatmul.mubr.f32.gmra.mrb[0].mxu0 %v567
        %v733 = vpop.f32.mrb[0].mxu0
        %v734 = vadd.f32 0.0, %v733
        %v735 = vpop.f32.mrb[0].mxu0
        %736 = vmatprep.mubr.f32.mxu0 0.0
        %737 = vmatmul.mubr.f32.gmra.mrb[0].mxu0 %v568
        %v738 = vpop.f32.mrb[0].mxu0
        %v739 = vadd.f32 0.0, %v738
        %v740 = vpop.f32.mrb[0].mxu0
        %741 = vmatprep.mubr.f32.mxu0 0.0
        %742 = vmatmul.mubr.f32.gmra.mrb[0].mxu0 %v569
        %v743 = vpop.f32.mrb[0].mxu0
        %v744 = vadd.f32 0.0, %v743
        %v745 = vpop.f32.mrb[0].mxu0
        %746 = vmatprep.mubr.f32.mxu0 0.0
        %747 = vmatmul.mubr.f32.gmra.mrb[0].mxu0 %v570
        %v748 = vpop.f32.mrb[0].mxu0
        %v749 = vadd.f32 0.0, %v748
        %v750 = vpop.f32.mrb[0].mxu0
        %751 = vmatprep.mubr.f32.mxu0 0.0
        %752 = vmatmul.mubr.f32.gmra.mrb[0].mxu0 %v571
        %v753 = vpop.f32.mrb[0].mxu0
        %v754 = vadd.f32 0.0, %v753
        %v755 = vpop.f32.mrb[0].mxu0
        %756 = vmatprep.mubr.f32.mxu0 0.0
        %757 = vmatmul.mubr.f32.gmra.mrb[0].mxu0 %v572
        %v758 = vpop.f32.mrb[0].mxu0
        %v759 = vadd.f32 0.0, %v758
        %v760 = vpop.f32.mrb[0].mxu0
        %761 = vmatprep.mubr.f32.mxu0 0.0
        %762 = vmatmul.mubr.f32.gmra.mrb[0].mxu0 %v573
        %v763 = vpop.f32.mrb[0].mxu0
        %v764 = vadd.f32 0.0, %v763
        %v765 = vpop.f32.mrb[0].mxu0
        %766 = vmatprep.mubr.f32.mxu0 0.0
        %767 = vmatmul.mubr.f32.gmra.mrb[0].mxu0 %v574
        %v768 = vpop.f32.mrb[0].mxu0
        %v769 = vadd.f32 0.0, %v768
        %v770 = vpop.f32.mrb[0].mxu0
        %771 = vmatprep.mubr.f32.mxu0 0.0
        %772 = vmatmul.mubr.f32.gmra.mrb[0].mxu0 %v575
        %v773 = vpop.f32.mrb[0].mxu0
        %v774 = vadd.f32 0.0, %v773
        %v775 = vpop.f32.mrb[0].mxu0
        %776 = vmatprep.mubr.f32.mxu0 0.0
        %777 = vmatmul.mubr.f32.gmra.mrb[0].mxu0 %v576
        %v778 = vpop.f32.mrb[0].mxu0
        %v779 = vadd.f32 0.0, %v778
        %v780 = vpop.f32.mrb[0].mxu0
        %781 = vmatprep.mubr.f32.mxu0 0.0
        %782 = vmatmul.mubr.f32.gmra.mrb[0].mxu0 %v577
        %v783 = vpop.f32.mrb[0].mxu0
        %v784 = vadd.f32 0.0, %v783
        %v785 = vpop.f32.mrb[0].mxu0
        %786 = vmatprep.mubr.f32.mxu0 0.0
        %787 = vmatmul.mubr.f32.gmra.mrb[0].mxu0 %v578
        %v788 = vpop.f32.mrb[0].mxu0
        %v789 = vadd.f32 0.0, %v788
        %v790 = vpop.f32.mrb[0].mxu0
        %791 = vmatprep.mubr.f32.mxu0 0.0
        %792 = vmatmul.mubr.f32.gmra.mrb[0].mxu0 %v579
        %v793 = vpop.f32.mrb[0].mxu0
        %v794 = vadd.f32 0.0, %v793
        %v795 = vpop.f32.mrb[0].mxu0
        %796 = vmatprep.mubr.f32.mxu0 0.0
        %797 = vmatmul.mubr.f32.gmra.mrb[0].mxu0 %v580
        %v798 = vpop.f32.mrb[0].mxu0
        %v799 = vadd.f32 0.0, %v798
        %v800 = vpop.f32.mrb[0].mxu0
        %801 = vmatprep.mubr.f32.mxu0 0.0
        %802 = vmatmul.mubr.f32.gmra.mrb[0].mxu0 %v581
        %v803 = vpop.f32.mrb[0].mxu0
        %v804 = vadd.f32 0.0, %v803
        %v805 = vpop.f32.mrb[0].mxu0
        %806 = vdwg.mxu0
        %v807 = vadd.f32 %v518, %v649
        %v808 = vadd.f32 %v519, %v654
        %v809 = vadd.f32 %v520, %v659
        %v810 = vadd.f32 %v521, %v664
        %v811 = vadd.f32 %v522, %v669
        %v812 = vadd.f32 %v523, %v674
        %v813 = vadd.f32 %v524, %v679
        %v814 = vadd.f32 %v525, %v684
        %v815 = vadd.f32 %v526, %v689
        %v816 = vadd.f32 %v527, %v694
        %v817 = vadd.f32 %v528, %v699
        %v818 = vadd.f32 %v529, %v704
        %v819 = vadd.f32 %v530, %v709
        %v820 = vadd.f32 %v531, %v714
        %v821 = vadd.f32 %v532, %v719
        %v822 = vadd.f32 %v533, %v724
        %v823 = vadd.f32 %v534, %v729
        %v824 = vadd.f32 %v535, %v734
        %v825 = vadd.f32 %v536, %v739
        %v826 = vadd.f32 %v537, %v744
        %v827 = vadd.f32 %v538, %v749
        %v828 = vadd.f32 %v539, %v754
        %v829 = vadd.f32 %v540, %v759
        %v830 = vadd.f32 %v541, %v764
        %v831 = vadd.f32 %v542, %v769
        %v832 = vadd.f32 %v543, %v774
        %v833 = vadd.f32 %v544, %v779
        %v834 = vadd.f32 %v545, %v784
        %v835 = vadd.f32 %v546, %v789
        %v836 = vadd.f32 %v547, %v794
        %v837 = vadd.f32 %v548, %v799
        %v838 = vadd.f32 %v549, %v804
        %839 = vst [vmem:[#allocation2] sm:$0xff] %v807
        %840 = vst [vmem:[#allocation2 + $0x8] sm:$0xff] %v808
        %841 = vst [vmem:[#allocation2 + $0x10] sm:$0xff] %v809
        %842 = vst [vmem:[#allocation2 + $0x18] sm:$0xff] %v810
        %843 = vst [vmem:[#allocation2 + $0x20] sm:$0xff] %v811
        %844 = vst [vmem:[#allocation2 + $0x28] sm:$0xff] %v812
        %845 = vst [vmem:[#allocation2 + $0x30] sm:$0xff] %v813
        %846 = vst [vmem:[#allocation2 + $0x38] sm:$0xff] %v814
        %847 = vst [vmem:[#allocation2 + $0x40] sm:$0xff] %v815
        %848 = vst [vmem:[#allocation2 + $0x48] sm:$0xff] %v816
        %849 = vst [vmem:[#allocation2 + $0x50] sm:$0xff] %v817
        %850 = vst [vmem:[#allocation2 + $0x58] sm:$0xff] %v818
        %851 = vst [vmem:[#allocation2 + $0x60] sm:$0xff] %v819
        %852 = vst [vmem:[#allocation2 + $0x68] sm:$0xff] %v820
        %853 = vst [vmem:[#allocation2 + $0x70] sm:$0xff] %v821
        %854 = vst [vmem:[#allocation2 + $0x78] sm:$0xff] %v822
        %855 = vst [vmem:[#allocation2 + $0x80] sm:$0xff] %v823
        %856 = vst [vmem:[#allocation2 + $0x88] sm:$0xff] %v824
        %857 = vst [vmem:[#allocation2 + $0x90] sm:$0xff] %v825
        %858 = vst [vmem:[#allocation2 + $0x98] sm:$0xff] %v826
        %859 = vst [vmem:[#allocation2 + $0xa0] sm:$0xff] %v827
        %860 = vst [vmem:[#allocation2 + $0xa8] sm:$0xff] %v828
        %861 = vst [vmem:[#allocation2 + $0xb0] sm:$0xff] %v829
        %862 = vst [vmem:[#allocation2 + $0xb8] sm:$0xff] %v830
        %863 = vst [vmem:[#allocation2 + $0xc0] sm:$0xff] %v831
        %864 = vst [vmem:[#allocation2 + $0xc8] sm:$0xff] %v832
        %865 = vst [vmem:[#allocation2 + $0xd0] sm:$0xff] %v833
        %866 = vst [vmem:[#allocation2 + $0xd8] sm:$0xff] %v834
        %867 = vst [vmem:[#allocation2 + $0xe0] sm:$0xff] %v835
        %868 = vst [vmem:[#allocation2 + $0xe8] sm:$0xff] %v836
        %869 = vst [vmem:[#allocation2 + $0xf0] sm:$0xff] %v837
        %870 = vst [vmem:[#allocation2 + $0xf8] sm:$0xff] %v838
        // Predicated region
        $region45: #{_forward.3} parent=35 // pred_check
          %p871 = pneg %p291
        $region46: #{_forward.3} parent=35 // pred_check_branch
          %873 = sbr.rel (%p871) target = $region48
        $region47: #{_forward.3} parent=35 // pred_region
          %s874 = sld [smem:[#allocation3 + %s327]]
          %v875 = vld [vmem:[%s3] sm:$0x1]
          %v876 = vstv %s874
          %v877 = vmul.f32 %v876, %v875
          %s878 = sld [smem:[#allocation3 + %s362]]
          %s879 = scalar_lea.vmem %s3, 1
          %v880 = vld [vmem:[%s879] sm:$0x1]
          %v881 = vstv %s878
          %v882 = vmul.f32 %v881, %v880
          %v883 = vadd.f32 %v877, %v882
          %s884 = sld [smem:[#allocation3 + %s414]]
          %s885 = scalar_lea.vmem %s3, 2
          %v886 = vld [vmem:[%s885] sm:$0x1]
          %v887 = vstv %s884
          %v888 = vmul.f32 %v887, %v886
          %v889 = vadd.f32 %v883, %v888
          %s890 = sld [smem:[#allocation3 + %s466]]
          %s891 = scalar_lea.vmem %s3, 3
          %v892 = vld [vmem:[%s891] sm:$0x1]
          %v893 = vstv %s890
          %v894 = vmul.f32 %v893, %v892
          %v895 = vadd.f32 %v889, %v894
          %v896 = vld [vmem:[#allocation2] sm:$0xff]
          %v897 = vld [vmem:[#allocation2 + $0x8] sm:$0xff]
          %v898 = vld [vmem:[#allocation2 + $0x10] sm:$0xff]
          %v899 = vld [vmem:[#allocation2 + $0x18] sm:$0xff]
          %v900 = vld [vmem:[#allocation2 + $0x20] sm:$0xff]
          %v901 = vld [vmem:[#allocation2 + $0x28] sm:$0xff]
          %v902 = vld [vmem:[#allocation2 + $0x30] sm:$0xff]
          %v903 = vld [vmem:[#allocation2 + $0x38] sm:$0xff]
          %v904 = vld [vmem:[#allocation2 + $0x40] sm:$0xff]
          %v905 = vld [vmem:[#allocation2 + $0x48] sm:$0xff]
          %v906 = vld [vmem:[#allocation2 + $0x50] sm:$0xff]
          %v907 = vld [vmem:[#allocation2 + $0x58] sm:$0xff]
          %v908 = vld [vmem:[#allocation2 + $0x60] sm:$0xff]
          %v909 = vld [vmem:[#allocation2 + $0x68] sm:$0xff]
          %v910 = vld [vmem:[#allocation2 + $0x70] sm:$0xff]
          %v911 = vld [vmem:[#allocation2 + $0x78] sm:$0xff]
          %v912 = vld [vmem:[#allocation2 + $0x80] sm:$0xff]
          %v913 = vld [vmem:[#allocation2 + $0x88] sm:$0xff]
          %v914 = vld [vmem:[#allocation2 + $0x90] sm:$0xff]
          %v915 = vld [vmem:[#allocation2 + $0x98] sm:$0xff]
          %v916 = vld [vmem:[#allocation2 + $0xa0] sm:$0xff]
          %v917 = vld [vmem:[#allocation2 + $0xa8] sm:$0xff]
          %v918 = vld [vmem:[#allocation2 + $0xb0] sm:$0xff]
          %v919 = vld [vmem:[#allocation2 + $0xb8] sm:$0xff]
          %v920 = vld [vmem:[#allocation2 + $0xc0] sm:$0xff]
          %v921 = vld [vmem:[#allocation2 + $0xc8] sm:$0xff]
          %v922 = vld [vmem:[#allocation2 + $0xd0] sm:$0xff]
          %v923 = vld [vmem:[#allocation2 + $0xd8] sm:$0xff]
          %v924 = vld [vmem:[#allocation2 + $0xe0] sm:$0xff]
          %v925 = vld [vmem:[#allocation2 + $0xe8] sm:$0xff]
          %v926 = vld [vmem:[#allocation2 + $0xf0] sm:$0xff]
          %v927 = vld [vmem:[#allocation2 + $0xf8] sm:$0xff]
          %v929 = vlaneseq
          %v930 = vshrl.u32 %v929, 7
          %v931 = vsub.s32 0, %v930
          %v932 = vrot.slane %v895, %v931
          %v934 = vadd.f32 %v896, %v932
          %v935 = vadd.f32 %v897, %v932
          %v936 = vadd.f32 %v898, %v932
          %v937 = vadd.f32 %v899, %v932
          %v938 = vadd.f32 %v900, %v932
          %v939 = vadd.f32 %v901, %v932
          %v940 = vadd.f32 %v902, %v932
          %v941 = vadd.f32 %v903, %v932
          %v942 = vadd.f32 %v904, %v932
          %v943 = vadd.f32 %v905, %v932
          %v944 = vadd.f32 %v906, %v932
          %v945 = vadd.f32 %v907, %v932
          %v946 = vadd.f32 %v908, %v932
          %v947 = vadd.f32 %v909, %v932
          %v948 = vadd.f32 %v910, %v932
          %v949 = vadd.f32 %v911, %v932
          %v950 = vadd.f32 %v912, %v932
          %v951 = vadd.f32 %v913, %v932
          %v952 = vadd.f32 %v914, %v932
          %v953 = vadd.f32 %v915, %v932
          %v954 = vadd.f32 %v916, %v932
          %v955 = vadd.f32 %v917, %v932
          %v956 = vadd.f32 %v918, %v932
          %v957 = vadd.f32 %v919, %v932
          %v958 = vadd.f32 %v920, %v932
          %v959 = vadd.f32 %v921, %v932
          %v960 = vadd.f32 %v922, %v932
          %v961 = vadd.f32 %v923, %v932
          %v962 = vadd.f32 %v924, %v932
          %v963 = vadd.f32 %v925, %v932
          %v964 = vadd.f32 %v926, %v932
          %v965 = vadd.f32 %v927, %v932
          %966 = vxpose.xlu0.b32.start [1/16] %v934, 128
          %967 = vxpose.xlu0.b32.cont [2/16] %v935, 128
          %968 = vxpose.xlu0.b32.cont [3/16] %v936, 128
          %969 = vxpose.xlu0.b32.cont [4/16] %v937, 128
          %970 = vxpose.xlu0.b32.cont [5/16] %v938, 128
          %971 = vxpose.xlu0.b32.cont [6/16] %v939, 128
          %972 = vxpose.xlu0.b32.cont [7/16] %v940, 128
          %973 = vxpose.xlu0.b32.cont [8/16] %v941, 128
          %974 = vxpose.xlu0.b32.cont [9/16] %v942, 128
          %975 = vxpose.xlu0.b32.cont [10/16] %v943, 128
          %976 = vxpose.xlu0.b32.cont [11/16] %v944, 128
          %977 = vxpose.xlu0.b32.cont [12/16] %v945, 128
          %978 = vxpose.xlu0.b32.cont [13/16] %v946, 128
          %979 = vxpose.xlu0.b32.cont [14/16] %v947, 128
          %980 = vxpose.xlu0.b32.cont [15/16] %v948, 128
          %981 = vxpose.xlu0.b32.end [16/16] %v949, 128
          %v982 = vpop.trf.xlu0
          %v983 = vpop.trf.xlu0
          %v984 = vpop.trf.xlu0
          %v985 = vpop.trf.xlu0
          %v986 = vpop.trf.xlu0
          %v987 = vpop.trf.xlu0
          %v988 = vpop.trf.xlu0
          %v989 = vpop.trf.xlu0
          %v990 = vpop.trf.xlu0
          %v991 = vpop.trf.xlu0
          %v992 = vpop.trf.xlu0
          %v993 = vpop.trf.xlu0
          %v994 = vpop.trf.xlu0
          %v995 = vpop.trf.xlu0
          %v996 = vpop.trf.xlu0
          %v997 = vpop.trf.xlu0
          %998 = vxpose.xlu0.b32.start [1/16] %v950, 128
          %999 = vxpose.xlu0.b32.cont [2/16] %v951, 128
          %1000 = vxpose.xlu0.b32.cont [3/16] %v952, 128
          %1001 = vxpose.xlu0.b32.cont [4/16] %v953, 128
          %1002 = vxpose.xlu0.b32.cont [5/16] %v954, 128
          %1003 = vxpose.xlu0.b32.cont [6/16] %v955, 128
          %1004 = vxpose.xlu0.b32.cont [7/16] %v956, 128
          %1005 = vxpose.xlu0.b32.cont [8/16] %v957, 128
          %1006 = vxpose.xlu0.b32.cont [9/16] %v958, 128
          %1007 = vxpose.xlu0.b32.cont [10/16] %v959, 128
          %1008 = vxpose.xlu0.b32.cont [11/16] %v960, 128
          %1009 = vxpose.xlu0.b32.cont [12/16] %v961, 128
          %1010 = vxpose.xlu0.b32.cont [13/16] %v962, 128
          %1011 = vxpose.xlu0.b32.cont [14/16] %v963, 128
          %1012 = vxpose.xlu0.b32.cont [15/16] %v964, 128
          %1013 = vxpose.xlu0.b32.end [16/16] %v965, 128
          %v1014 = vpop.trf.xlu0
          %v1015 = vpop.trf.xlu0
          %v1016 = vpop.trf.xlu0
          %v1017 = vpop.trf.xlu0
          %v1018 = vpop.trf.xlu0
          %v1019 = vpop.trf.xlu0
          %v1020 = vpop.trf.xlu0
          %v1021 = vpop.trf.xlu0
          %v1022 = vpop.trf.xlu0
          %v1023 = vpop.trf.xlu0
          %v1024 = vpop.trf.xlu0
          %v1025 = vpop.trf.xlu0
          %v1026 = vpop.trf.xlu0
          %v1027 = vpop.trf.xlu0
          %v1028 = vpop.trf.xlu0
          %v1029 = vpop.trf.xlu0
          %1030 = vst [vmem:[%s289] sm:$0xff] %v982
          %1031 = vst [vmem:[%s289 + $0x8] sm:$0xff] %v1014
          %1032 = vst [vmem:[%s289 + $0x10] sm:$0xff] %v983
          %1033 = vst [vmem:[%s289 + $0x18] sm:$0xff] %v1015
          %1034 = vst [vmem:[%s289 + $0x20] sm:$0xff] %v984
          %1035 = vst [vmem:[%s289 + $0x28] sm:$0xff] %v1016
          %1036 = vst [vmem:[%s289 + $0x30] sm:$0xff] %v985
          %1037 = vst [vmem:[%s289 + $0x38] sm:$0xff] %v1017
          %1038 = vst [vmem:[%s289 + $0x40] sm:$0xff] %v986
          %1039 = vst [vmem:[%s289 + $0x48] sm:$0xff] %v1018
          %1040 = vst [vmem:[%s289 + $0x50] sm:$0xff] %v987
          %1041 = vst [vmem:[%s289 + $0x58] sm:$0xff] %v1019
          %1042 = vst [vmem:[%s289 + $0x60] sm:$0xff] %v988
          %1043 = vst [vmem:[%s289 + $0x68] sm:$0xff] %v1020
          %1044 = vst [vmem:[%s289 + $0x70] sm:$0xff] %v989
          %1045 = vst [vmem:[%s289 + $0x78] sm:$0xff] %v1021
          %1046 = vst [vmem:[%s289 + $0x80] sm:$0xff] %v990
          %1047 = vst [vmem:[%s289 + $0x88] sm:$0xff] %v1022
          %1048 = vst [vmem:[%s289 + $0x90] sm:$0xff] %v991
          %1049 = vst [vmem:[%s289 + $0x98] sm:$0xff] %v1023
          %1050 = vst [vmem:[%s289 + $0xa0] sm:$0xff] %v992
          %1051 = vst [vmem:[%s289 + $0xa8] sm:$0xff] %v1024
          %1052 = vst [vmem:[%s289 + $0xb0] sm:$0xff] %v993
          %1053 = vst [vmem:[%s289 + $0xb8] sm:$0xff] %v1025
          %1054 = vst [vmem:[%s289 + $0xc0] sm:$0xff] %v994
          %1055 = vst [vmem:[%s289 + $0xc8] sm:$0xff] %v1026
          %1056 = vst [vmem:[%s289 + $0xd0] sm:$0xff] %v995
          %1057 = vst [vmem:[%s289 + $0xd8] sm:$0xff] %v1027
          %1058 = vst [vmem:[%s289 + $0xe0] sm:$0xff] %v996
          %1059 = vst [vmem:[%s289 + $0xe8] sm:$0xff] %v1028
          %1060 = vst [vmem:[%s289 + $0xf0] sm:$0xff] %v997
          %1061 = vst [vmem:[%s289 + $0xf8] sm:$0xff] %v1029
        $region48: #{_forward.3} parent=35 // pred_fallthru
          _
        %s1062 = smul.u32 2, %s22
        %p1063 = scmp.lt.s32.totalorder %s21, 1
        %s1064 = scalar_select %p1063, %s21, 1
        %p1065 = scmp.lt.s32.totalorder %s1062, 1
        %s1066 = scalar_select %p1065, %s1062, 1
        %s1067 = smul.addr %s1064, 32
        %s1068 = sadd.s32 %s1066, %s1067
        %s1069 = smul.addr %s1068, 8
        %s1070 = scalar_lea.vmem %s4, %s1069
        // Predicated region
        $region49: #{_forward.3} parent=35 // pred_check
          %p1071 = pneg %p153
        $region50: #{_forward.3} parent=35 // pred_check_branch
          %1073 = sbr.rel (%p1071) target = $region52
        $region51: #{_forward.3} parent=35 // pred_region
          %s1074 = smul.u32 2, %s22
        $region52: #{_forward.3} parent=35 // pred_fallthru
          _
      $region36: #{_forward.3} parent=5 // pred_fallthru
        _
      %p1075 = scmp.le.s32.totalorder 2, %s11
      // Predicated region
      $region53: #{_forward.3} parent=5 // pred_check
        %p1076 = pneg %p1075
      $region54: #{_forward.3} parent=5 // pred_check_branch
        %1078 = sbr.rel (%p1076) target = $region56
      $region55: #{_forward.3} parent=5 // pred_region
        %s1079 = ssub.s32 %s11, 2
        // Predicated region
        $region57: #{_forward.3} parent=55 // pred_check
          %p1080 = pneg %p159
        $region58: #{_forward.3} parent=55 // pred_check_branch
          %1082 = sbr.rel (%p1080) target = $region60
        $region59: #{_forward.3} parent=55 // pred_region
          %s1083 = smul.u32 2, %s25
          %p1084 = scmp.lt.s32.totalorder %s24, 1
          %s1085 = scalar_select %p1084, %s24, 1
          %p1086 = scmp.lt.s32.totalorder %s1083, 1
          %s1087 = scalar_select %p1086, %s1083, 1
          %s1088 = smul.addr %s1085, 32
          %s1089 = sadd.s32 %s1087, %s1088
          %s1090 = smul.addr %s1089, 8
          %s1091 = scalar_lea.vmem %s4, %s1090
        $region60: #{_forward.3} parent=55 // pred_fallthru
          _
      $region56: #{_forward.3} parent=5 // pred_fallthru
        _
    $region6: #{_forward.3} parent=1 // loop_footer
      %s15 = sadd.s32 1, %s11
    $region7: #{_forward.3} parent=1 // loop_footer_branch
      %10 = sbr.rel target = $region3
    $region8: #{_forward.3} parent=1 // loop_exit
      _
    %1092 = vsyncpa [#allocation4], 1
    %s1093 = scalar_lea.sflag [#allocation4], 1
    %1094 = vsyncpa %s1093, 1

</llo_original>
